<compile_context>
chip_gen: v7x
topology: tpu7x:2x2x1
jax: 0.10.0
libtpu: 0.0.40
codegen_flags: <defaults>
</compile_context>

<pallas_src>
import functools
import math

import jax
import jax.numpy as jnp
from jax.experimental import pallas as pl
from jax.experimental.pallas import tpu as pltpu


# ----------------------------- tiling helpers -----------------------------

def _pick_tile(dim, max_tile, align):
    """Largest tile <= max_tile that is a multiple of `align` and divides dim,
    else the full dim (whole-dim blocks are always legal)."""
    if dim <= max_tile:
        return dim
    t = (max_tile // align) * align
    while t >= align:
        if dim % t == 0:
            return t
        t -= align
    return dim


def _row_tile(M, cap=512):
    """Row tile for kernels whose only grid axis is M: keep >= 2 blocks when M is
    large so both v7x TensorCores get work on the 'parallel' axis."""
    if M <= 8:
        return M
    return _pick_tile(M, min(cap, max(M // 2, 8)), 8)


def _heads_per_block(n_heads, d_head):
    """Smallest head group (dividing n_heads) whose width is lane-dense (multiple
    of 128 lanes); falls back to all heads (group width == d_model)."""
    for g in range(1, n_heads):
        if n_heads % g == 0 and (g * d_head) % 128 == 0:
            return g
    return n_heads


def _matmul_cost(M, N, K, x_dt, w_dt, o_dt, transcendentals=0):
    return pl.CostEstimate(
        flops=2 * M * N * K,
        transcendentals=transcendentals,
        bytes_accessed=(M * K * jnp.dtype(x_dt).itemsize
                        + K * N * jnp.dtype(w_dt).itemsize
                        + M * N * jnp.dtype(o_dt).itemsize + N * 4))


# ----------------------------- Pallas kernels -----------------------------

def _linear_kernel(x_ref, w_ref, b_ref, o_ref, *, act):
    # Full-K single-shot matmul: bf16 inputs, f32 accumulation on the MXU.
    y = jnp.dot(x_ref[...], w_ref[...], preferred_element_type=jnp.float32) + b_ref[...]
    if act == "gelu":
        y = jax.nn.gelu(y)        # tanh approx; see TODO(synk)
    o_ref[...] = y.astype(o_ref.dtype)


def linear(x, w, b, *, act=None, out_dtype=jnp.bfloat16, tm_cap=512, tn_cap=1024):
    """x: (M, K) bf16, w: (K, N) bf16, b: (N,) f32 -> (M, N) out_dtype."""
    M, K = x.shape
    Kw, N = w.shape
    assert K == Kw
    tm = _pick_tile(M, tm_cap, 8)
    tn = _pick_tile(N, tn_cap, 256)      # 256-aligned N tiles for the 2x256^2 MXU
    grid = (M // tm, N // tn)
    return pl.pallas_call(
        functools.partial(_linear_kernel, act=act),
        out_shape=jax.ShapeDtypeStruct((M, N), out_dtype),
        grid=grid,
        in_specs=[
            pl.BlockSpec((tm, K), lambda i, j: (i, 0)),
            pl.BlockSpec((K, tn), lambda i, j: (0, j)),
            pl.BlockSpec((1, tn), lambda i, j: (0, j)),
        ],
        out_specs=pl.BlockSpec((tm, tn), lambda i, j: (i, j)),
        compiler_params=pltpu.CompilerParams(
            dimension_semantics=("parallel", "parallel")),
        cost_estimate=_matmul_cost(M, N, K, x.dtype, w.dtype, out_dtype,
                                   transcendentals=M * N if act == "gelu" else 0),
    )(x, w, b.reshape(1, N))


def _qkv_kernel(x_ref, w_ref, b_ref, o_ref):
    y = jnp.dot(x_ref[...], w_ref[...], preferred_element_type=jnp.float32) + b_ref[...]
    o_ref[0] = y.astype(o_ref.dtype)


def qkv_linear(x, w, b, *, n_groups, out_dtype=jnp.bfloat16, tm_cap=512):
    """Fused QKV projection that emits a head-group-major layout directly via its
    out_spec: (n_groups, M, 3*gw) with per-group columns [Q | K | V]."""
    M, K = x.shape
    Kw, N = w.shape
    assert K == Kw
    gw3 = N // n_groups
    tm = _pick_tile(M, tm_cap, 8)
    grid = (M // tm, n_groups)
    return pl.pallas_call(
        _qkv_kernel,
        out_shape=jax.ShapeDtypeStruct((n_groups, M, gw3), out_dtype),
        grid=grid,
        in_specs=[
            pl.BlockSpec((tm, K), lambda i, j: (i, 0)),
            pl.BlockSpec((K, gw3), lambda i, j: (0, j)),
            pl.BlockSpec((1, gw3), lambda i, j: (0, j)),
        ],
        out_specs=pl.BlockSpec((1, tm, gw3), lambda i, j: (j, i, 0)),
        compiler_params=pltpu.CompilerParams(
            dimension_semantics=("parallel", "parallel")),
        cost_estimate=_matmul_cost(M, N, K, x.dtype, w.dtype, out_dtype),
    )(x, w, b.reshape(1, N))


def _linear_add_ln_kernel(x_ref, w_ref, b_ref, r_ref, g_ref, beta_ref, o_ref, *, eps):
    # matmul + bias + residual-add + LayerNorm, all in one pass over full rows.
    y = jnp.dot(x_ref[...], w_ref[...], preferred_element_type=jnp.float32)
    y = y + b_ref[...] + r_ref[...].astype(jnp.float32)
    mu = jnp.mean(y, axis=-1, keepdims=True)
    yc = y - mu
    var = jnp.mean(yc * yc, axis=-1, keepdims=True)
    o_ref[...] = (yc * jax.lax.rsqrt(var + eps) * g_ref[...]
                  + beta_ref[...]).astype(o_ref.dtype)


def linear_add_ln(x, w, b, *, residual, gamma, beta, eps=1e-12, out_dtype=jnp.bfloat16):
    """x @ w + b + residual, then LayerNorm over the last dim (tn == N == D so the
    epilogue sees full rows). Single bf16 output = the residual stream."""
    M, K = x.shape
    Kw, N = w.shape
    assert K == Kw
    tm = _row_tile(M)
    grid = (M // tm,)
    row_in = pl.BlockSpec((tm, K), lambda i: (i, 0))
    row_d = pl.BlockSpec((tm, N), lambda i: (i, 0))
    vec = pl.BlockSpec((1, N), lambda i: (0, 0))
    return pl.pallas_call(
        functools.partial(_linear_add_ln_kernel, eps=eps),
        out_shape=jax.ShapeDtypeStruct((M, N), out_dtype),
        grid=grid,
        in_specs=[row_in,
                  pl.BlockSpec((K, N), lambda i: (0, 0)),
                  vec, row_d, vec, vec],
        out_specs=row_d,
        compiler_params=pltpu.CompilerParams(dimension_semantics=("parallel",)),
        cost_estimate=_matmul_cost(M, N, K, x.dtype, w.dtype, out_dtype),
    )(x, w, b.reshape(1, N), residual, gamma.reshape(1, N), beta.reshape(1, N))


def _ln_kernel(x_ref, g_ref, b_ref, o_ref, *, eps):
    x = x_ref[...].astype(jnp.float32)
    mu = jnp.mean(x, axis=-1, keepdims=True)
    xc = x - mu
    var = jnp.mean(xc * xc, axis=-1, keepdims=True)
    o_ref[...] = (xc * jax.lax.rsqrt(var + eps) * g_ref[...] + b_ref[...]).astype(o_ref.dtype)


def layernorm(x, gamma, beta, *, eps=1e-12, out_dtype=jnp.bfloat16):
    """Row-tiled LayerNorm (used once, for the embedding output)."""
    M, D = x.shape
    tm = _row_tile(M)
    grid = (M // tm,)
    row = pl.BlockSpec((tm, D), lambda i: (i, 0))
    vec = pl.BlockSpec((1, D), lambda i: (0, 0))
    return pl.pallas_call(
        functools.partial(_ln_kernel, eps=eps),
        out_shape=jax.ShapeDtypeStruct((M, D), out_dtype),
        grid=grid,
        in_specs=[row, vec, vec],
        out_specs=row,
        compiler_params=pltpu.CompilerParams(dimension_semantics=("parallel",)),
    )(x, gamma.reshape(1, D), beta.reshape(1, D))


def _attention_kernel(qkv_ref, o_ref, *, heads_blk, d_head):
    # qkv_ref block: (1, 1, L, 3*gw) bf16 for one (batch, head-group) pair; the
    # group columns are [Q | K | V], each gw = heads_blk*d_head lanes wide.
    gw = heads_blk * d_head
    qkv = qkv_ref[0, 0]                                   # one lane-dense (L, 3*gw) load
    outs = []
    for h in range(heads_blk):
        q = qkv[:, h * d_head:(h + 1) * d_head]                        # scale folded into W_q
        k = qkv[:, gw + h * d_head:gw + (h + 1) * d_head]
        v = qkv[:, 2 * gw + h * d_head:2 * gw + (h + 1) * d_head]
        # q @ k^T without an explicit transpose
        s = jax.lax.dot_general(q, k, (((1,), (1,)), ((), ())),
                                preferred_element_type=jnp.float32)    # (L, L) f32
        m = jnp.max(s, axis=-1, keepdims=True)
        p = jnp.exp(s - m)
        l = jnp.sum(p, axis=-1, keepdims=True)
        o_h = jnp.dot(p.astype(qkv.dtype), v, preferred_element_type=jnp.float32)
        outs.append((o_h * (1.0 / l)).astype(o_ref.dtype))             # bf16 now -> low vreg pressure
    o_ref[0] = jnp.concatenate(outs, axis=-1)                          # single (L, gw) lane-dense store


def attention(qkv_groups, *, d_model, d_head, out_dtype=jnp.bfloat16):
    """qkv_groups: (n_groups, B, L, 3*gw) bf16 -> (B, L, d_model) bf16, token-major
    (column h*d_head..): no XLA transposes needed before or after."""
    NG, B, L, gw3 = qkv_groups.shape
    gw = gw3 // 3
    heads_blk = gw // d_head
    return pl.pallas_call(
        functools.partial(_attention_kernel, heads_blk=heads_blk, d_head=d_head),
        out_shape=jax.ShapeDtypeStruct((B, L, d_model), out_dtype),
        grid=(B, NG),
        in_specs=[pl.BlockSpec((1, 1, L, gw3), lambda b, p: (p, b, 0, 0))],
        out_specs=pl.BlockSpec((1, L, gw), lambda b, p: (b, 0, p)),
        compiler_params=pltpu.CompilerParams(
            dimension_semantics=("parallel", "parallel")),
    )(qkv_groups)


# ----------------------------- model (glue in plain JAX) -----------------------------

def init_params(key, *, vocab, max_len, d_model, n_heads, n_layers, d_mlp):
    d_head = d_model // n_heads
    g = _heads_per_block(n_heads, d_head)
    n_groups = n_heads // g
    gw = g * d_head
    scale = 1.0 / math.sqrt(d_head)

    def nrm(k, shape, std=0.02):
        return std * jax.random.normal(k, shape, dtype=jnp.float32)

    keys = iter(jax.random.split(key, 8 + 8 * n_layers))
    params = {
        "tok_emb": nrm(next(keys), (vocab, d_model)),
        "pos_emb": nrm(next(keys), (max_len, d_model)),
        "type_emb": nrm(next(keys), (2, d_model)),
        "emb_ln_g": jnp.ones((d_model,), jnp.float32),
        "emb_ln_b": jnp.zeros((d_model,), jnp.float32),
        "layers": [],
    }
    for _ in range(n_layers):
        # Standard per-head Q/K/V weights; the softmax 1/sqrt(d_head) scale is
        # folded into W_q / b_q at build time (mathematically identical).
        wq = nrm(next(keys), (d_model, d_model)) * scale
        wk = nrm(next(keys), (d_model, d_model))
        wv = nrm(next(keys), (d_model, d_model))
        bq = jnp.zeros((d_model,), jnp.float32) * scale
        bk = jnp.zeros((d_model,), jnp.float32)
        bv = jnp.zeros((d_model,), jnp.float32)
        # Regroup columns head-group-major: per group p, columns are [Q_p | K_p | V_p]
        # (this is how real checkpoint weights would be permuted).
        w_qkv = jnp.concatenate(
            [wq.reshape(d_model, n_groups, 1, gw),
             wk.reshape(d_model, n_groups, 1, gw),
             wv.reshape(d_model, n_groups, 1, gw)], axis=2
        ).reshape(d_model, 3 * d_model).astype(jnp.bfloat16)
        b_qkv = jnp.concatenate(
            [bq.reshape(n_groups, 1, gw),
             bk.reshape(n_groups, 1, gw),
             bv.reshape(n_groups, 1, gw)], axis=1).reshape(3 * d_model)
        lyr = {
            "w_qkv": w_qkv, "b_qkv": b_qkv,
            "wo": nrm(next(keys), (d_model, d_model)).astype(jnp.bfloat16),
            "bo": jnp.zeros((d_model,), jnp.float32),
            "ln1_g": jnp.ones((d_model,), jnp.float32),
            "ln1_b": jnp.zeros((d_model,), jnp.float32),
            "w1": nrm(next(keys), (d_model, d_mlp)).astype(jnp.bfloat16),
            "b1": jnp.zeros((d_mlp,), jnp.float32),
            "w2": nrm(next(keys), (d_mlp, d_model)).astype(jnp.bfloat16),
            "b2": jnp.zeros((d_model,), jnp.float32),
            "ln2_g": jnp.ones((d_model,), jnp.float32),
            "ln2_b": jnp.zeros((d_model,), jnp.float32),
        }
        params["layers"].append(lyr)
    return params


def biomedclip_text_forward(params, token_ids, *, n_heads):
    """Returns z = outputs[1] = token hidden states with the CLS token removed."""
    B, L = token_ids.shape
    D = params["tok_emb"].shape[1]
    d_head = D // n_heads
    g = _heads_per_block(n_heads, d_head)
    n_groups = n_heads // g
    gw = g * d_head

    # Embeddings (gathers + adds are glue; normalization runs as a Pallas kernel).
    emb = (params["tok_emb"][token_ids]
           + params["pos_emb"][:L][None, :, :]
           + params["type_emb"][0][None, None, :])                    # (B, L, D) f32
    x = layernorm(emb.reshape(B * L, D),
                  params["emb_ln_g"], params["emb_ln_b"])              # bf16 residual stream

    for lyr in params["layers"]:
        # --- self attention (post-LN BERT block) ---
        qkv = qkv_linear(x, lyr["w_qkv"], lyr["b_qkv"], n_groups=n_groups)   # (NG, B*L, 3*gw) bf16
        a = attention(qkv.reshape(n_groups, B, L, 3 * gw),
                      d_model=D, d_head=d_head)                              # (B, L, D) bf16
        x = linear_add_ln(a.reshape(B * L, D), lyr["wo"], lyr["bo"],
                          residual=x, gamma=lyr["ln1_g"], beta=lyr["ln1_b"])  # fused wo + add + LN
        # --- feed forward ---
        h = linear(x, lyr["w1"], lyr["b1"], act="gelu")                      # (B*L, MLP) bf16
        x = linear_add_ln(h, lyr["w2"], lyr["b2"],
                          residual=x, gamma=lyr["ln2_g"], beta=lyr["ln2_b"])  # fused w2 + add + LN

    x = x.reshape(B, L, D).astype(jnp.float32)
    # HFTextEncoder with ClsPooler + output_tokens=True:
    # outputs[1] == hidden states with the CLS token dropped.
    return x[:, 1:, :]


# ----------------------------- main -----------------------------

if __name__ == "__main__":
    # small, forward-consistent shapes (real module: L=256, D=768, H=12, 12 layers, MLP=3072)
    B, L = 2, 8
    VOCAB = 64
    D, H, LAYERS, MLP = 32, 4, 2, 64

    key = jax.random.PRNGKey(0)
    k_param, k_ids = jax.random.split(key)
    params = init_params(k_param, vocab=VOCAB, max_len=L, d_model=D,
                         n_heads=H, n_layers=LAYERS, d_mlp=MLP)
    token_ids = jax.random.randint(k_ids, (B, L), 0, VOCAB, dtype=jnp.int32)

    fwd = jax.jit(functools.partial(biomedclip_text_forward, n_heads=H))
    z = fwd(params, token_ids)
    z = jax.block_until_ready(z)

    assert z.shape == (B, L - 1, D), z.shape
    assert z.dtype == jnp.float32
    assert bool(jnp.all(jnp.isfinite(z)))
    print("KERNEL_OK")
</pallas_src>

<mosaic_0001>
module attributes {stable_mosaic.version = 11 : i64} {
  func.func @_qkv_kernel(%arg0: i32, %arg1: i32, %arg2: memref<16x32xbf16, #tpu.memory_space<vmem>>, %arg3: memref<32x96xbf16, #tpu.memory_space<vmem>>, %arg4: memref<1x96xf32, #tpu.memory_space<vmem>>, %arg5: memref<1x16x96xbf16, #tpu.memory_space<vmem>>) attributes {dimension_semantics = [#tpu.dimension_semantics<parallel>, #tpu.dimension_semantics<parallel>], iteration_bounds = array<i64: 1, 1>, scalar_prefetch = 0 : i64, scratch_operands = 0 : i64, tpu.core_type = #tpu.core_type<tc>, window_params = [{transform_indices = @transform_0, window_bounds = array<i64: 16, 32>}, {transform_indices = @transform_1, window_bounds = array<i64: 32, 96>}, {transform_indices = @transform_2, window_bounds = array<i64: 1, 96>}, {transform_indices = @transform_3, window_bounds = array<i64: 1, 16, 96>}]} {
    %c0 = arith.constant 0 : index
    %c0_0 = arith.constant 0 : index
    %0 = vector.load %arg2[%c0, %c0_0] : memref<16x32xbf16, #tpu.memory_space<vmem>>, vector<16x32xbf16>
    %c0_1 = arith.constant 0 : index
    %c0_2 = arith.constant 0 : index
    %1 = vector.load %arg3[%c0_1, %c0_2] : memref<32x96xbf16, #tpu.memory_space<vmem>>, vector<32x96xbf16>
    %cst = arith.constant dense<0.000000e+00> : vector<16x96xf32>
    %2 = tpu.matmul %0, %1, %cst {dimension_numbers = #tpu.dot_dimension_numbers<[1], [0], [0], [1], [0, 0, 1, 1], [], []>} : vector<16x32xbf16>, vector<32x96xbf16>, vector<16x96xf32> -> vector<16x96xf32>
    %c0_3 = arith.constant 0 : index
    %c0_4 = arith.constant 0 : index
    %3 = vector.load %arg4[%c0_3, %c0_4] : memref<1x96xf32, #tpu.memory_space<vmem>>, vector<1x96xf32>
    %4 = vector.broadcast %3 : vector<1x96xf32> to vector<16x96xf32>
    %5 = arith.addf %2, %4 : vector<16x96xf32>
    %6 = arith.truncf %5 : vector<16x96xf32> to vector<16x96xbf16>
    %c0_5 = arith.constant 0 : index
    %c0_6 = arith.constant 0 : index
    %c0_7 = arith.constant 0 : index
    %7 = vector.load %arg5[%c0_5, %c0_6, %c0_7] : memref<1x16x96xbf16, #tpu.memory_space<vmem>>, vector<1x16x96xbf16>
    %8 = vector.shape_cast %7 : vector<1x16x96xbf16> to vector<16x96xbf16>
    %9 = vector.shape_cast %6 : vector<16x96xbf16> to vector<1x16x96xbf16>
    tpu.vector_store %arg5[%c0_5, %c0_6, %c0_7], %9 {strides = array<i32>} : memref<1x16x96xbf16, #tpu.memory_space<vmem>>, vector<1x16x96xbf16>,
    return
  }
  func.func @transform_0(%arg0: i32, %arg1: i32) -> (i32, i32) {
    %c0_i32 = arith.constant 0 : i32
    %c0_i32_0 = arith.constant 0 : i32
    return %arg0, %c0_i32 : i32, i32
  }
  func.func @transform_1(%arg0: i32, %arg1: i32) -> (i32, i32) {
    %c0_i32 = arith.constant 0 : i32
    %c0_i32_0 = arith.constant 0 : i32
    return %c0_i32, %arg1 : i32, i32
  }
  func.func @transform_2(%arg0: i32, %arg1: i32) -> (i32, i32) {
    %c0_i32 = arith.constant 0 : i32
    %c0_i32_0 = arith.constant 0 : i32
    return %c0_i32, %arg1 : i32, i32
  }
  func.func @transform_3(%arg0: i32, %arg1: i32) -> (i32, i32, i32) {
    %c0_i32 = arith.constant 0 : i32
    %c0_i32_0 = arith.constant 0 : i32
    return %arg1, %arg0, %c0_i32 : i32, i32, i32
  }
}

module attributes {stable_mosaic.version = 11 : i64} {
  func.func @_attention_kernel(%arg0: i32, %arg1: i32, %arg2: memref<1x1x8x96xbf16, #tpu.memory_space<vmem>>, %arg3: memref<1x8x32xbf16, #tpu.memory_space<vmem>>) attributes {dimension_semantics = [#tpu.dimension_semantics<parallel>, #tpu.dimension_semantics<parallel>], iteration_bounds = array<i64: 2, 1>, scalar_prefetch = 0 : i64, scratch_operands = 0 : i64, tpu.core_type = #tpu.core_type<tc>, window_params = [{transform_indices = @transform_0, window_bounds = array<i64: 1, 1, 8, 96>}, {transform_indices = @transform_1, window_bounds = array<i64: 1, 8, 32>}]} {
    %c0 = arith.constant 0 : index
    %c0_0 = arith.constant 0 : index
    %c0_1 = arith.constant 0 : index
    %c0_2 = arith.constant 0 : index
    %0 = vector.load %arg2[%c0, %c0_0, %c0_1, %c0_2] : memref<1x1x8x96xbf16, #tpu.memory_space<vmem>>, vector<1x1x8x96xbf16>
    %1 = vector.shape_cast %0 : vector<1x1x8x96xbf16> to vector<8x96xbf16>
    %2 = vector.extract_strided_slice %1 {offsets = [0, 0], sizes = [8, 8], strides = [1, 1]} : vector<8x96xbf16> to vector<8x8xbf16>
    %3 = vector.extract_strided_slice %1 {offsets = [0, 32], sizes = [8, 8], strides = [1, 1]} : vector<8x96xbf16> to vector<8x8xbf16>
    %4 = vector.extract_strided_slice %1 {offsets = [0, 64], sizes = [8, 8], strides = [1, 1]} : vector<8x96xbf16> to vector<8x8xbf16>
    %cst = arith.constant dense<0.000000e+00> : vector<8x8xf32>
    %5 = tpu.matmul %2, %3, %cst {dimension_numbers = #tpu.dot_dimension_numbers<[1], [1], [0], [0], [0, 0, 1, 0], [], []>} : vector<8x8xbf16>, vector<8x8xbf16>, vector<8x8xf32> -> vector<8x8xf32>
    %cst_3 = arith.constant dense<0xFF800000> : vector<8xf32>
    %6 = vector.multi_reduction <maximumf>, %5, %cst_3 [1] : vector<8x8xf32> to vector<8xf32>
    %7 = vector.shape_cast %6 : vector<8xf32> to vector<8x1xf32>
    %8 = vector.broadcast %7 : vector<8x1xf32> to vector<8x8xf32>
    %9 = arith.subf %5, %8 : vector<8x8xf32>
    %10 = math.exp %9 : vector<8x8xf32>
    %cst_4 = arith.constant dense<0.000000e+00> : vector<8xf32>
    %11 = vector.multi_reduction <add>, %10, %cst_4 [1] : vector<8x8xf32> to vector<8xf32>
    %12 = vector.shape_cast %11 : vector<8xf32> to vector<8x1xf32>
    %13 = arith.truncf %10 : vector<8x8xf32> to vector<8x8xbf16>
    %cst_5 = arith.constant dense<0.000000e+00> : vector<8x8xf32>
    %14 = tpu.matmul %13, %4, %cst_5 {dimension_numbers = #tpu.dot_dimension_numbers<[1], [0], [0], [1], [0, 0, 1, 1], [], []>} : vector<8x8xbf16>, vector<8x8xbf16>, vector<8x8xf32> -> vector<8x8xf32>
    %cst_6 = arith.constant 1.000000e+00 : f32
    %15 = vector.broadcast %cst_6 : f32 to vector<8x1xf32>
    %16 = arith.divf %15, %12 : vector<8x1xf32>
    %17 = vector.broadcast %16 : vector<8x1xf32> to vector<8x8xf32>
    %18 = arith.mulf %14, %17 : vector<8x8xf32>
    %19 = arith.truncf %18 : vector<8x8xf32> to vector<8x8xbf16>
    %20 = vector.extract_strided_slice %1 {offsets = [0, 8], sizes = [8, 8], strides = [1, 1]} : vector<8x96xbf16> to vector<8x8xbf16>
    %21 = vector.extract_strided_slice %1 {offsets = [0, 40], sizes = [8, 8], strides = [1, 1]} : vector<8x96xbf16> to vector<8x8xbf16>
    %22 = vector.extract_strided_slice %1 {offsets = [0, 72], sizes = [8, 8], strides = [1, 1]} : vector<8x96xbf16> to vector<8x8xbf16>
    %cst_7 = arith.constant dense<0.000000e+00> : vector<8x8xf32>
    %23 = tpu.matmul %20, %21, %cst_7 {dimension_numbers = #tpu.dot_dimension_numbers<[1], [1], [0], [0], [0, 0, 1, 0], [], []>} : vector<8x8xbf16>, vector<8x8xbf16>, vector<8x8xf32> -> vector<8x8xf32>
    %cst_8 = arith.constant dense<0xFF800000> : vector<8xf32>
    %24 = vector.multi_reduction <maximumf>, %23, %cst_8 [1] : vector<8x8xf32> to vector<8xf32>
    %25 = vector.shape_cast %24 : vector<8xf32> to vector<8x1xf32>
    %26 = vector.broadcast %25 : vector<8x1xf32> to vector<8x8xf32>
    %27 = arith.subf %23, %26 : vector<8x8xf32>
    %28 = math.exp %27 : vector<8x8xf32>
    %cst_9 = arith.constant dense<0.000000e+00> : vector<8xf32>
    %29 = vector.multi_reduction <add>, %28, %cst_9 [1] : vector<8x8xf32> to vector<8xf32>
    %30 = vector.shape_cast %29 : vector<8xf32> to vector<8x1xf32>
    %31 = arith.truncf %28 : vector<8x8xf32> to vector<8x8xbf16>
    %cst_10 = arith.constant dense<0.000000e+00> : vector<8x8xf32>
    %32 = tpu.matmul %31, %22, %cst_10 {dimension_numbers = #tpu.dot_dimension_numbers<[1], [0], [0], [1], [0, 0, 1, 1], [], []>} : vector<8x8xbf16>, vector<8x8xbf16>, vector<8x8xf32> -> vector<8x8xf32>
    %cst_11 = arith.constant 1.000000e+00 : f32
    %33 = vector.broadcast %cst_11 : f32 to vector<8x1xf32>
    %34 = arith.divf %33, %30 : vector<8x1xf32>
    %35 = vector.broadcast %34 : vector<8x1xf32> to vector<8x8xf32>
    %36 = arith.mulf %32, %35 : vector<8x8xf32>
    %37 = arith.truncf %36 : vector<8x8xf32> to vector<8x8xbf16>
    %38 = vector.extract_strided_slice %1 {offsets = [0, 16], sizes = [8, 8], strides = [1, 1]} : vector<8x96xbf16> to vector<8x8xbf16>
    %39 = vector.extract_strided_slice %1 {offsets = [0, 48], sizes = [8, 8], strides = [1, 1]} : vector<8x96xbf16> to vector<8x8xbf16>
    %40 = vector.extract_strided_slice %1 {offsets = [0, 80], sizes = [8, 8], strides = [1, 1]} : vector<8x96xbf16> to vector<8x8xbf16>
    %cst_12 = arith.constant dense<0.000000e+00> : vector<8x8xf32>
    %41 = tpu.matmul %38, %39, %cst_12 {dimension_numbers = #tpu.dot_dimension_numbers<[1], [1], [0], [0], [0, 0, 1, 0], [], []>} : vector<8x8xbf16>, vector<8x8xbf16>, vector<8x8xf32> -> vector<8x8xf32>
    %cst_13 = arith.constant dense<0xFF800000> : vector<8xf32>
    %42 = vector.multi_reduction <maximumf>, %41, %cst_13 [1] : vector<8x8xf32> to vector<8xf32>
    %43 = vector.shape_cast %42 : vector<8xf32> to vector<8x1xf32>
    %44 = vector.broadcast %43 : vector<8x1xf32> to vector<8x8xf32>
    %45 = arith.subf %41, %44 : vector<8x8xf32>
    %46 = math.exp %45 : vector<8x8xf32>
    %cst_14 = arith.constant dense<0.000000e+00> : vector<8xf32>
    %47 = vector.multi_reduction <add>, %46, %cst_14 [1] : vector<8x8xf32> to vector<8xf32>
    %48 = vector.shape_cast %47 : vector<8xf32> to vector<8x1xf32>
    %49 = arith.truncf %46 : vector<8x8xf32> to vector<8x8xbf16>
    %cst_15 = arith.constant dense<0.000000e+00> : vector<8x8xf32>
    %50 = tpu.matmul %49, %40, %cst_15 {dimension_numbers = #tpu.dot_dimension_numbers<[1], [0], [0], [1], [0, 0, 1, 1], [], []>} : vector<8x8xbf16>, vector<8x8xbf16>, vector<8x8xf32> -> vector<8x8xf32>
    %cst_16 = arith.constant 1.000000e+00 : f32
    %51 = vector.broadcast %cst_16 : f32 to vector<8x1xf32>
    %52 = arith.divf %51, %48 : vector<8x1xf32>
    %53 = vector.broadcast %52 : vector<8x1xf32> to vector<8x8xf32>
    %54 = arith.mulf %50, %53 : vector<8x8xf32>
    %55 = arith.truncf %54 : vector<8x8xf32> to vector<8x8xbf16>
    %56 = vector.extract_strided_slice %1 {offsets = [0, 24], sizes = [8, 8], strides = [1, 1]} : vector<8x96xbf16> to vector<8x8xbf16>
    %57 = vector.extract_strided_slice %1 {offsets = [0, 56], sizes = [8, 8], strides = [1, 1]} : vector<8x96xbf16> to vector<8x8xbf16>
    %58 = vector.extract_strided_slice %1 {offsets = [0, 88], sizes = [8, 8], strides = [1, 1]} : vector<8x96xbf16> to vector<8x8xbf16>
    %cst_17 = arith.constant dense<0.000000e+00> : vector<8x8xf32>
    %59 = tpu.matmul %56, %57, %cst_17 {dimension_numbers = #tpu.dot_dimension_numbers<[1], [1], [0], [0], [0, 0, 1, 0], [], []>} : vector<8x8xbf16>, vector<8x8xbf16>, vector<8x8xf32> -> vector<8x8xf32>
    %cst_18 = arith.constant dense<0xFF800000> : vector<8xf32>
    %60 = vector.multi_reduction <maximumf>, %59, %cst_18 [1] : vector<8x8xf32> to vector<8xf32>
    %61 = vector.shape_cast %60 : vector<8xf32> to vector<8x1xf32>
    %62 = vector.broadcast %61 : vector<8x1xf32> to vector<8x8xf32>
    %63 = arith.subf %59, %62 : vector<8x8xf32>
    %64 = math.exp %63 : vector<8x8xf32>
    %cst_19 = arith.constant dense<0.000000e+00> : vector<8xf32>
    %65 = vector.multi_reduction <add>, %64, %cst_19 [1] : vector<8x8xf32> to vector<8xf32>
    %66 = vector.shape_cast %65 : vector<8xf32> to vector<8x1xf32>
    %67 = arith.truncf %64 : vector<8x8xf32> to vector<8x8xbf16>
    %cst_20 = arith.constant dense<0.000000e+00> : vector<8x8xf32>
    %68 = tpu.matmul %67, %58, %cst_20 {dimension_numbers = #tpu.dot_dimension_numbers<[1], [0], [0], [1], [0, 0, 1, 1], [], []>} : vector<8x8xbf16>, vector<8x8xbf16>, vector<8x8xf32> -> vector<8x8xf32>
    %cst_21 = arith.constant 1.000000e+00 : f32
    %69 = vector.broadcast %cst_21 : f32 to vector<8x1xf32>
    %70 = arith.divf %69, %66 : vector<8x1xf32>
    %71 = vector.broadcast %70 : vector<8x1xf32> to vector<8x8xf32>
    %72 = arith.mulf %68, %71 : vector<8x8xf32>
    %73 = arith.truncf %72 : vector<8x8xf32> to vector<8x8xbf16>
    %74 = tpu.concatenate %19, %37, %55, %73 in 1 : vector<8x8xbf16>, vector<8x8xbf16>, vector<8x8xbf16>, vector<8x8xbf16> -> vector<8x32xbf16>
    %c0_22 = arith.constant 0 : index
    %c0_23 = arith.constant 0 : index
    %c0_24 = arith.constant 0 : index
    %75 = vector.load %arg3[%c0_22, %c0_23, %c0_24] : memref<1x8x32xbf16, #tpu.memory_space<vmem>>, vector<1x8x32xbf16>
    %76 = vector.shape_cast %75 : vector<1x8x32xbf16> to vector<8x32xbf16>
    %77 = vector.shape_cast %74 : vector<8x32xbf16> to vector<1x8x32xbf16>
    tpu.vector_store %arg3[%c0_22, %c0_23, %c0_24], %77 {strides = array<i32>} : memref<1x8x32xbf16, #tpu.memory_space<vmem>>, vector<1x8x32xbf16>,
    return
  }
  func.func @transform_0(%arg0: i32, %arg1: i32) -> (i32, i32, i32, i32) {
    %c0_i32 = arith.constant 0 : i32
    %c0_i32_0 = arith.constant 0 : i32
    %c0_i32_1 = arith.constant 0 : i32
    return %arg1, %arg0, %c0_i32, %c0_i32_0 : i32, i32, i32, i32
  }
  func.func @transform_1(%arg0: i32, %arg1: i32) -> (i32, i32, i32) {
    %c0_i32 = arith.constant 0 : i32
    %c0_i32_0 = arith.constant 0 : i32
    return %arg0, %c0_i32, %arg1 : i32, i32, i32
  }
}

module attributes {stable_mosaic.version = 11 : i64} {
  func.func @_linear_add_ln_kernel(%arg0: i32, %arg1: memref<8x32xbf16, #tpu.memory_space<vmem>>, %arg2: memref<32x32xbf16, #tpu.memory_space<vmem>>, %arg3: memref<1x32xf32, #tpu.memory_space<vmem>>, %arg4: memref<8x32xbf16, #tpu.memory_space<vmem>>, %arg5: memref<1x32xf32, #tpu.memory_space<vmem>>, %arg6: memref<1x32xf32, #tpu.memory_space<vmem>>, %arg7: memref<8x32xbf16, #tpu.memory_space<vmem>>) attributes {dimension_semantics = [#tpu.dimension_semantics<parallel>], iteration_bounds = array<i64: 2>, scalar_prefetch = 0 : i64, scratch_operands = 0 : i64, tpu.core_type = #tpu.core_type<tc>, window_params = [{transform_indices = @transform_0, window_bounds = array<i64: 8, 32>}, {pipeline_mode = #tpu.pipeline_mode<synchronous>, transform_indices = @transform_1, window_bounds = array<i64: 32, 32>}, {pipeline_mode = #tpu.pipeline_mode<synchronous>, transform_indices = @transform_2, window_bounds = array<i64: 1, 32>}, {transform_indices = @transform_3, window_bounds = array<i64: 8, 32>}, {pipeline_mode = #tpu.pipeline_mode<synchronous>, transform_indices = @transform_4, window_bounds = array<i64: 1, 32>}, {pipeline_mode = #tpu.pipeline_mode<synchronous>, transform_indices = @transform_5, window_bounds = array<i64: 1, 32>}, {transform_indices = @transform_6, window_bounds = array<i64: 8, 32>}]} {
    %c0 = arith.constant 0 : index
    %c0_0 = arith.constant 0 : index
    %0 = vector.load %arg1[%c0, %c0_0] : memref<8x32xbf16, #tpu.memory_space<vmem>>, vector<8x32xbf16>
    %c0_1 = arith.constant 0 : index
    %c0_2 = arith.constant 0 : index
    %1 = vector.load %arg2[%c0_1, %c0_2] : memref<32x32xbf16, #tpu.memory_space<vmem>>, vector<32x32xbf16>
    %cst = arith.constant dense<0.000000e+00> : vector<8x32xf32>
    %2 = tpu.matmul %0, %1, %cst {dimension_numbers = #tpu.dot_dimension_numbers<[1], [0], [0], [1], [0, 0, 1, 1], [], []>} : vector<8x32xbf16>, vector<32x32xbf16>, vector<8x32xf32> -> vector<8x32xf32>
    %c0_3 = arith.constant 0 : index
    %c0_4 = arith.constant 0 : index
    %3 = vector.load %arg3[%c0_3, %c0_4] : memref<1x32xf32, #tpu.memory_space<vmem>>, vector<1x32xf32>
    %4 = vector.broadcast %3 : vector<1x32xf32> to vector<8x32xf32>
    %5 = arith.addf %2, %4 : vector<8x32xf32>
    %c0_5 = arith.constant 0 : index
    %c0_6 = arith.constant 0 : index
    %6 = vector.load %arg4[%c0_5, %c0_6] : memref<8x32xbf16, #tpu.memory_space<vmem>>, vector<8x32xbf16>
    %7 = arith.extf %6 : vector<8x32xbf16> to vector<8x32xf32>
    %8 = arith.addf %5, %7 : vector<8x32xf32>
    %cst_7 = arith.constant dense<0.000000e+00> : vector<8xf32>
    %9 = vector.multi_reduction <add>, %8, %cst_7 [1] : vector<8x32xf32> to vector<8xf32>
    %10 = vector.shape_cast %9 : vector<8xf32> to vector<8x1xf32>
    %cst_8 = arith.constant 3.200000e+01 : f32
    %11 = vector.broadcast %cst_8 : f32 to vector<8x1xf32>
    %12 = arith.divf %10, %11 : vector<8x1xf32>
    %13 = vector.broadcast %12 : vector<8x1xf32> to vector<8x32xf32>
    %14 = arith.subf %8, %13 : vector<8x32xf32>
    %15 = arith.mulf %14, %14 : vector<8x32xf32>
    %cst_9 = arith.constant dense<0.000000e+00> : vector<8xf32>
    %16 = vector.multi_reduction <add>, %15, %cst_9 [1] : vector<8x32xf32> to vector<8xf32>
    %17 = vector.shape_cast %16 : vector<8xf32> to vector<8x1xf32>
    %cst_10 = arith.constant 3.200000e+01 : f32
    %18 = vector.broadcast %cst_10 : f32 to vector<8x1xf32>
    %19 = arith.divf %17, %18 : vector<8x1xf32>
    %cst_11 = arith.constant 9.99999996E-13 : f32
    %20 = vector.broadcast %cst_11 : f32 to vector<8x1xf32>
    %21 = arith.addf %19, %20 : vector<8x1xf32>
    %22 = math.rsqrt %21 : vector<8x1xf32>
    %23 = vector.broadcast %22 : vector<8x1xf32> to vector<8x32xf32>
    %24 = arith.mulf %14, %23 : vector<8x32xf32>
    %c0_12 = arith.constant 0 : index
    %c0_13 = arith.constant 0 : index
    %25 = vector.load %arg5[%c0_12, %c0_13] : memref<1x32xf32, #tpu.memory_space<vmem>>, vector<1x32xf32>
    %26 = vector.broadcast %25 : vector<1x32xf32> to vector<8x32xf32>
    %27 = arith.mulf %24, %26 : vector<8x32xf32>
    %c0_14 = arith.constant 0 : index
    %c0_15 = arith.constant 0 : index
    %28 = vector.load %arg6[%c0_14, %c0_15] : memref<1x32xf32, #tpu.memory_space<vmem>>, vector<1x32xf32>
    %29 = vector.broadcast %28 : vector<1x32xf32> to vector<8x32xf32>
    %30 = arith.addf %27, %29 : vector<8x32xf32>
    %31 = arith.truncf %30 : vector<8x32xf32> to vector<8x32xbf16>
    %c0_16 = arith.constant 0 : index
    %c0_17 = arith.constant 0 : index
    %32 = vector.load %arg7[%c0_16, %c0_17] : memref<8x32xbf16, #tpu.memory_space<vmem>>, vector<8x32xbf16>
    tpu.vector_store %arg7[%c0_16, %c0_17], %31 {strides = array<i32>} : memref<8x32xbf16, #tpu.memory_space<vmem>>, vector<8x32xbf16>,
    return
  }
  func.func @transform_0(%arg0: i32) -> (i32, i32) {
    %c0_i32 = arith.constant 0 : i32
    %c0_i32_0 = arith.constant 0 : i32
    return %arg0, %c0_i32 : i32, i32
  }
  func.func @transform_1(%arg0: i32) -> (i32, i32) {
    %c0_i32 = arith.constant 0 : i32
    %c0_i32_0 = arith.constant 0 : i32
    %c0_i32_1 = arith.constant 0 : i32
    return %c0_i32, %c0_i32_0 : i32, i32
  }
  func.func @transform_2(%arg0: i32) -> (i32, i32) {
    %c0_i32 = arith.constant 0 : i32
    %c0_i32_0 = arith.constant 0 : i32
    %c0_i32_1 = arith.constant 0 : i32
    return %c0_i32, %c0_i32_0 : i32, i32
  }
  func.func @transform_3(%arg0: i32) -> (i32, i32) {
    %c0_i32 = arith.constant 0 : i32
    %c0_i32_0 = arith.constant 0 : i32
    return %arg0, %c0_i32 : i32, i32
  }
  func.func @transform_4(%arg0: i32) -> (i32, i32) {
    %c0_i32 = arith.constant 0 : i32
    %c0_i32_0 = arith.constant 0 : i32
    %c0_i32_1 = arith.constant 0 : i32
    return %c0_i32, %c0_i32_0 : i32, i32
  }
  func.func @transform_5(%arg0: i32) -> (i32, i32) {
    %c0_i32 = arith.constant 0 : i32
    %c0_i32_0 = arith.constant 0 : i32
    %c0_i32_1 = arith.constant 0 : i32
    return %c0_i32, %c0_i32_0 : i32, i32
  }
  func.func @transform_6(%arg0: i32) -> (i32, i32) {
    %c0_i32 = arith.constant 0 : i32
    %c0_i32_0 = arith.constant 0 : i32
    return %arg0, %c0_i32 : i32, i32
  }
}

module attributes {stable_mosaic.version = 11 : i64} {
  func.func @_ln_kernel(%arg0: i32, %arg1: memref<8x32xf32, #tpu.memory_space<vmem>>, %arg2: memref<1x32xf32, #tpu.memory_space<vmem>>, %arg3: memref<1x32xf32, #tpu.memory_space<vmem>>, %arg4: memref<8x32xbf16, #tpu.memory_space<vmem>>) attributes {dimension_semantics = [#tpu.dimension_semantics<parallel>], iteration_bounds = array<i64: 2>, scalar_prefetch = 0 : i64, scratch_operands = 0 : i64, tpu.core_type = #tpu.core_type<tc>, window_params = [{transform_indices = @transform_0, window_bounds = array<i64: 8, 32>}, {pipeline_mode = #tpu.pipeline_mode<synchronous>, transform_indices = @transform_1, window_bounds = array<i64: 1, 32>}, {pipeline_mode = #tpu.pipeline_mode<synchronous>, transform_indices = @transform_2, window_bounds = array<i64: 1, 32>}, {transform_indices = @transform_3, window_bounds = array<i64: 8, 32>}]} {
    %c0 = arith.constant 0 : index
    %c0_0 = arith.constant 0 : index
    %0 = vector.load %arg1[%c0, %c0_0] : memref<8x32xf32, #tpu.memory_space<vmem>>, vector<8x32xf32>
    %cst = arith.constant dense<0.000000e+00> : vector<8xf32>
    %1 = vector.multi_reduction <add>, %0, %cst [1] : vector<8x32xf32> to vector<8xf32>
    %2 = vector.shape_cast %1 : vector<8xf32> to vector<8x1xf32>
    %cst_1 = arith.constant 3.200000e+01 : f32
    %3 = vector.broadcast %cst_1 : f32 to vector<8x1xf32>
    %4 = arith.divf %2, %3 : vector<8x1xf32>
    %5 = vector.broadcast %4 : vector<8x1xf32> to vector<8x32xf32>
    %6 = arith.subf %0, %5 : vector<8x32xf32>
    %7 = arith.mulf %6, %6 : vector<8x32xf32>
    %cst_2 = arith.constant dense<0.000000e+00> : vector<8xf32>
    %8 = vector.multi_reduction <add>, %7, %cst_2 [1] : vector<8x32xf32> to vector<8xf32>
    %9 = vector.shape_cast %8 : vector<8xf32> to vector<8x1xf32>
    %cst_3 = arith.constant 3.200000e+01 : f32
    %10 = vector.broadcast %cst_3 : f32 to vector<8x1xf32>
    %11 = arith.divf %9, %10 : vector<8x1xf32>
    %cst_4 = arith.constant 9.99999996E-13 : f32
    %12 = vector.broadcast %cst_4 : f32 to vector<8x1xf32>
    %13 = arith.addf %11, %12 : vector<8x1xf32>
    %14 = math.rsqrt %13 : vector<8x1xf32>
    %15 = vector.broadcast %14 : vector<8x1xf32> to vector<8x32xf32>
    %16 = arith.mulf %6, %15 : vector<8x32xf32>
    %c0_5 = arith.constant 0 : index
    %c0_6 = arith.constant 0 : index
    %17 = vector.load %arg2[%c0_5, %c0_6] : memref<1x32xf32, #tpu.memory_space<vmem>>, vector<1x32xf32>
    %18 = vector.broadcast %17 : vector<1x32xf32> to vector<8x32xf32>
    %19 = arith.mulf %16, %18 : vector<8x32xf32>
    %c0_7 = arith.constant 0 : index
    %c0_8 = arith.constant 0 : index
    %20 = vector.load %arg3[%c0_7, %c0_8] : memref<1x32xf32, #tpu.memory_space<vmem>>, vector<1x32xf32>
    %21 = vector.broadcast %20 : vector<1x32xf32> to vector<8x32xf32>
    %22 = arith.addf %19, %21 : vector<8x32xf32>
    %23 = arith.truncf %22 : vector<8x32xf32> to vector<8x32xbf16>
    %c0_9 = arith.constant 0 : index
    %c0_10 = arith.constant 0 : index
    %24 = vector.load %arg4[%c0_9, %c0_10] : memref<8x32xbf16, #tpu.memory_space<vmem>>, vector<8x32xbf16>
    tpu.vector_store %arg4[%c0_9, %c0_10], %23 {strides = array<i32>} : memref<8x32xbf16, #tpu.memory_space<vmem>>, vector<8x32xbf16>,
    return
  }
  func.func @transform_0(%arg0: i32) -> (i32, i32) {
    %c0_i32 = arith.constant 0 : i32
    %c0_i32_0 = arith.constant 0 : i32
    return %arg0, %c0_i32 : i32, i32
  }
  func.func @transform_1(%arg0: i32) -> (i32, i32) {
    %c0_i32 = arith.constant 0 : i32
    %c0_i32_0 = arith.constant 0 : i32
    %c0_i32_1 = arith.constant 0 : i32
    return %c0_i32, %c0_i32_0 : i32, i32
  }
  func.func @transform_2(%arg0: i32) -> (i32, i32) {
    %c0_i32 = arith.constant 0 : i32
    %c0_i32_0 = arith.constant 0 : i32
    %c0_i32_1 = arith.constant 0 : i32
    return %c0_i32, %c0_i32_0 : i32, i32
  }
  func.func @transform_3(%arg0: i32) -> (i32, i32) {
    %c0_i32 = arith.constant 0 : i32
    %c0_i32_0 = arith.constant 0 : i32
    return %arg0, %c0_i32 : i32, i32
  }
}

module attributes {stable_mosaic.version = 11 : i64} {
  func.func @_linear_kernel(%arg0: i32, %arg1: i32, %arg2: memref<16x32xbf16, #tpu.memory_space<vmem>>, %arg3: memref<32x64xbf16, #tpu.memory_space<vmem>>, %arg4: memref<1x64xf32, #tpu.memory_space<vmem>>, %arg5: memref<16x64xbf16, #tpu.memory_space<vmem>>) attributes {dimension_semantics = [#tpu.dimension_semantics<parallel>, #tpu.dimension_semantics<parallel>], iteration_bounds = array<i64: 1, 1>, scalar_prefetch = 0 : i64, scratch_operands = 0 : i64, tpu.core_type = #tpu.core_type<tc>, window_params = [{transform_indices = @transform_0, window_bounds = array<i64: 16, 32>}, {transform_indices = @transform_1, window_bounds = array<i64: 32, 64>}, {transform_indices = @transform_2, window_bounds = array<i64: 1, 64>}, {transform_indices = @transform_3, window_bounds = array<i64: 16, 64>}]} {
    %c0 = arith.constant 0 : index
    %c0_0 = arith.constant 0 : index
    %0 = vector.load %arg2[%c0, %c0_0] : memref<16x32xbf16, #tpu.memory_space<vmem>>, vector<16x32xbf16>
    %c0_1 = arith.constant 0 : index
    %c0_2 = arith.constant 0 : index
    %1 = vector.load %arg3[%c0_1, %c0_2] : memref<32x64xbf16, #tpu.memory_space<vmem>>, vector<32x64xbf16>
    %cst = arith.constant dense<0.000000e+00> : vector<16x64xf32>
    %2 = tpu.matmul %0, %1, %cst {dimension_numbers = #tpu.dot_dimension_numbers<[1], [0], [0], [1], [0, 0, 1, 1], [], []>} : vector<16x32xbf16>, vector<32x64xbf16>, vector<16x64xf32> -> vector<16x64xf32>
    %c0_3 = arith.constant 0 : index
    %c0_4 = arith.constant 0 : index
    %3 = vector.load %arg4[%c0_3, %c0_4] : memref<1x64xf32, #tpu.memory_space<vmem>>, vector<1x64xf32>
    %4 = vector.broadcast %3 : vector<1x64xf32> to vector<16x64xf32>
    %5 = arith.addf %2, %4 : vector<16x64xf32>
    %6 = arith.mulf %5, %5 : vector<16x64xf32>
    %7 = arith.mulf %5, %6 : vector<16x64xf32>
    %cst_5 = arith.constant 4.471500e-02 : f32
    %8 = vector.broadcast %cst_5 : f32 to vector<16x64xf32>
    %9 = arith.mulf %8, %7 : vector<16x64xf32>
    %10 = arith.addf %5, %9 : vector<16x64xf32>
    %cst_6 = arith.constant 0.797884583 : f32
    %11 = vector.broadcast %cst_6 : f32 to vector<16x64xf32>
    %12 = arith.mulf %11, %10 : vector<16x64xf32>
    %13 = math.tanh %12 : vector<16x64xf32>
    %cst_7 = arith.constant 1.000000e+00 : f32
    %14 = vector.broadcast %cst_7 : f32 to vector<16x64xf32>
    %15 = arith.addf %14, %13 : vector<16x64xf32>
    %cst_8 = arith.constant 5.000000e-01 : f32
    %16 = vector.broadcast %cst_8 : f32 to vector<16x64xf32>
    %17 = arith.mulf %16, %15 : vector<16x64xf32>
    %18 = arith.mulf %5, %17 : vector<16x64xf32>
    %19 = arith.truncf %18 : vector<16x64xf32> to vector<16x64xbf16>
    %c0_9 = arith.constant 0 : index
    %c0_10 = arith.constant 0 : index
    %20 = vector.load %arg5[%c0_9, %c0_10] : memref<16x64xbf16, #tpu.memory_space<vmem>>, vector<16x64xbf16>
    tpu.vector_store %arg5[%c0_9, %c0_10], %19 {strides = array<i32>} : memref<16x64xbf16, #tpu.memory_space<vmem>>, vector<16x64xbf16>,
    return
  }
  func.func @transform_0(%arg0: i32, %arg1: i32) -> (i32, i32) {
    %c0_i32 = arith.constant 0 : i32
    %c0_i32_0 = arith.constant 0 : i32
    return %arg0, %c0_i32 : i32, i32
  }
  func.func @transform_1(%arg0: i32, %arg1: i32) -> (i32, i32) {
    %c0_i32 = arith.constant 0 : i32
    %c0_i32_0 = arith.constant 0 : i32
    return %c0_i32, %arg1 : i32, i32
  }
  func.func @transform_2(%arg0: i32, %arg1: i32) -> (i32, i32) {
    %c0_i32 = arith.constant 0 : i32
    %c0_i32_0 = arith.constant 0 : i32
    return %c0_i32, %arg1 : i32, i32
  }
  func.func @transform_3(%arg0: i32, %arg1: i32) -> (i32, i32) {
    %c0_i32 = arith.constant 0 : i32
    return %arg0, %arg1 : i32, i32
  }
}

module attributes {stable_mosaic.version = 11 : i64} {
  func.func @_linear_add_ln_kernel(%arg0: i32, %arg1: memref<8x64xbf16, #tpu.memory_space<vmem>>, %arg2: memref<64x32xbf16, #tpu.memory_space<vmem>>, %arg3: memref<1x32xf32, #tpu.memory_space<vmem>>, %arg4: memref<8x32xbf16, #tpu.memory_space<vmem>>, %arg5: memref<1x32xf32, #tpu.memory_space<vmem>>, %arg6: memref<1x32xf32, #tpu.memory_space<vmem>>, %arg7: memref<8x32xbf16, #tpu.memory_space<vmem>>) attributes {dimension_semantics = [#tpu.dimension_semantics<parallel>], iteration_bounds = array<i64: 2>, scalar_prefetch = 0 : i64, scratch_operands = 0 : i64, tpu.core_type = #tpu.core_type<tc>, window_params = [{transform_indices = @transform_0, window_bounds = array<i64: 8, 64>}, {pipeline_mode = #tpu.pipeline_mode<synchronous>, transform_indices = @transform_1, window_bounds = array<i64: 64, 32>}, {pipeline_mode = #tpu.pipeline_mode<synchronous>, transform_indices = @transform_2, window_bounds = array<i64: 1, 32>}, {transform_indices = @transform_3, window_bounds = array<i64: 8, 32>}, {pipeline_mode = #tpu.pipeline_mode<synchronous>, transform_indices = @transform_4, window_bounds = array<i64: 1, 32>}, {pipeline_mode = #tpu.pipeline_mode<synchronous>, transform_indices = @transform_5, window_bounds = array<i64: 1, 32>}, {transform_indices = @transform_6, window_bounds = array<i64: 8, 32>}]} {
    %c0 = arith.constant 0 : index
    %c0_0 = arith.constant 0 : index
    %0 = vector.load %arg1[%c0, %c0_0] : memref<8x64xbf16, #tpu.memory_space<vmem>>, vector<8x64xbf16>
    %c0_1 = arith.constant 0 : index
    %c0_2 = arith.constant 0 : index
    %1 = vector.load %arg2[%c0_1, %c0_2] : memref<64x32xbf16, #tpu.memory_space<vmem>>, vector<64x32xbf16>
    %cst = arith.constant dense<0.000000e+00> : vector<8x32xf32>
    %2 = tpu.matmul %0, %1, %cst {dimension_numbers = #tpu.dot_dimension_numbers<[1], [0], [0], [1], [0, 0, 1, 1], [], []>} : vector<8x64xbf16>, vector<64x32xbf16>, vector<8x32xf32> -> vector<8x32xf32>
    %c0_3 = arith.constant 0 : index
    %c0_4 = arith.constant 0 : index
    %3 = vector.load %arg3[%c0_3, %c0_4] : memref<1x32xf32, #tpu.memory_space<vmem>>, vector<1x32xf32>
    %4 = vector.broadcast %3 : vector<1x32xf32> to vector<8x32xf32>
    %5 = arith.addf %2, %4 : vector<8x32xf32>
    %c0_5 = arith.constant 0 : index
    %c0_6 = arith.constant 0 : index
    %6 = vector.load %arg4[%c0_5, %c0_6] : memref<8x32xbf16, #tpu.memory_space<vmem>>, vector<8x32xbf16>
    %7 = arith.extf %6 : vector<8x32xbf16> to vector<8x32xf32>
    %8 = arith.addf %5, %7 : vector<8x32xf32>
    %cst_7 = arith.constant dense<0.000000e+00> : vector<8xf32>
    %9 = vector.multi_reduction <add>, %8, %cst_7 [1] : vector<8x32xf32> to vector<8xf32>
    %10 = vector.shape_cast %9 : vector<8xf32> to vector<8x1xf32>
    %cst_8 = arith.constant 3.200000e+01 : f32
    %11 = vector.broadcast %cst_8 : f32 to vector<8x1xf32>
    %12 = arith.divf %10, %11 : vector<8x1xf32>
    %13 = vector.broadcast %12 : vector<8x1xf32> to vector<8x32xf32>
    %14 = arith.subf %8, %13 : vector<8x32xf32>
    %15 = arith.mulf %14, %14 : vector<8x32xf32>
    %cst_9 = arith.constant dense<0.000000e+00> : vector<8xf32>
    %16 = vector.multi_reduction <add>, %15, %cst_9 [1] : vector<8x32xf32> to vector<8xf32>
    %17 = vector.shape_cast %16 : vector<8xf32> to vector<8x1xf32>
    %cst_10 = arith.constant 3.200000e+01 : f32
    %18 = vector.broadcast %cst_10 : f32 to vector<8x1xf32>
    %19 = arith.divf %17, %18 : vector<8x1xf32>
    %cst_11 = arith.constant 9.99999996E-13 : f32
    %20 = vector.broadcast %cst_11 : f32 to vector<8x1xf32>
    %21 = arith.addf %19, %20 : vector<8x1xf32>
    %22 = math.rsqrt %21 : vector<8x1xf32>
    %23 = vector.broadcast %22 : vector<8x1xf32> to vector<8x32xf32>
    %24 = arith.mulf %14, %23 : vector<8x32xf32>
    %c0_12 = arith.constant 0 : index
    %c0_13 = arith.constant 0 : index
    %25 = vector.load %arg5[%c0_12, %c0_13] : memref<1x32xf32, #tpu.memory_space<vmem>>, vector<1x32xf32>
    %26 = vector.broadcast %25 : vector<1x32xf32> to vector<8x32xf32>
    %27 = arith.mulf %24, %26 : vector<8x32xf32>
    %c0_14 = arith.constant 0 : index
    %c0_15 = arith.constant 0 : index
    %28 = vector.load %arg6[%c0_14, %c0_15] : memref<1x32xf32, #tpu.memory_space<vmem>>, vector<1x32xf32>
    %29 = vector.broadcast %28 : vector<1x32xf32> to vector<8x32xf32>
    %30 = arith.addf %27, %29 : vector<8x32xf32>
    %31 = arith.truncf %30 : vector<8x32xf32> to vector<8x32xbf16>
    %c0_16 = arith.constant 0 : index
    %c0_17 = arith.constant 0 : index
    %32 = vector.load %arg7[%c0_16, %c0_17] : memref<8x32xbf16, #tpu.memory_space<vmem>>, vector<8x32xbf16>
    tpu.vector_store %arg7[%c0_16, %c0_17], %31 {strides = array<i32>} : memref<8x32xbf16, #tpu.memory_space<vmem>>, vector<8x32xbf16>,
    return
  }
  func.func @transform_0(%arg0: i32) -> (i32, i32) {
    %c0_i32 = arith.constant 0 : i32
    %c0_i32_0 = arith.constant 0 : i32
    return %arg0, %c0_i32 : i32, i32
  }
  func.func @transform_1(%arg0: i32) -> (i32, i32) {
    %c0_i32 = arith.constant 0 : i32
    %c0_i32_0 = arith.constant 0 : i32
    %c0_i32_1 = arith.constant 0 : i32
    return %c0_i32, %c0_i32_0 : i32, i32
  }
  func.func @transform_2(%arg0: i32) -> (i32, i32) {
    %c0_i32 = arith.constant 0 : i32
    %c0_i32_0 = arith.constant 0 : i32
    %c0_i32_1 = arith.constant 0 : i32
    return %c0_i32, %c0_i32_0 : i32, i32
  }
  func.func @transform_3(%arg0: i32) -> (i32, i32) {
    %c0_i32 = arith.constant 0 : i32
    %c0_i32_0 = arith.constant 0 : i32
    return %arg0, %c0_i32 : i32, i32
  }
  func.func @transform_4(%arg0: i32) -> (i32, i32) {
    %c0_i32 = arith.constant 0 : i32
    %c0_i32_0 = arith.constant 0 : i32
    %c0_i32_1 = arith.constant 0 : i32
    return %c0_i32, %c0_i32_0 : i32, i32
  }
  func.func @transform_5(%arg0: i32) -> (i32, i32) {
    %c0_i32 = arith.constant 0 : i32
    %c0_i32_0 = arith.constant 0 : i32
    %c0_i32_1 = arith.constant 0 : i32
    return %c0_i32, %c0_i32_0 : i32, i32
  }
  func.func @transform_6(%arg0: i32) -> (i32, i32) {
    %c0_i32 = arith.constant 0 : i32
    %c0_i32_0 = arith.constant 0 : i32
    return %arg0, %c0_i32 : i32, i32
  }
}

</mosaic_0001>

<llo_original>
// kernel: biomedclip_text_forward.12
$region0: #{biomedclip_text_forward.12}
  #allocation0 [shape = 'u32[]', space=smem, size = 0x4, offset = 0x4, fixed_abs, tag = 'smem constant byte address 0x4 - core index']
  #allocation1 [shape = 'u32[144,128]{1,0:T(1,128)}', space=vmem, size = 0x12000, scoped, tag = 'internal scratch']
  %s0 = inlined_call_operand.vmem [shape: bf16[16,32], index: 0, kind: input, shape index: {}]
  %s1 = inlined_call_operand.vmem [shape: bf16[32,96], index: 1, kind: input, shape index: {}]
  %s2 = inlined_call_operand.vmem [shape: f32[1,96], index: 2, kind: input, shape index: {}]
  %s3 = inlined_call_operand.vmem [shape: bf16[1,16,96], index: 3, kind: output, shape index: {}]
  %s4 = sld [smem:[#allocation0]]
  $region22: #{biomedclip_text_forward.12} parent=0
    _
  %s6 = ssub.s32 1, %s4
  %s7 = scalar_select 0, %s6, %s4
  // Predicated region
  $region2: #{biomedclip_text_forward.12} parent=0 // pred_check
    _
  $region3: #{biomedclip_text_forward.12} parent=0 // pred_check_branch
    %9 = sbr.rel (0) target = $region5
  $region4: #{biomedclip_text_forward.12} parent=0 // pred_region
    _
  $region5: #{biomedclip_text_forward.12} parent=0 // pred_fallthru
    _
  // Predicated region
  $region6: #{biomedclip_text_forward.12} parent=0 // pred_check
    _
  $region7: #{biomedclip_text_forward.12} parent=0 // pred_check_branch
    %11 = sbr.rel (0) target = $region9
  $region8: #{biomedclip_text_forward.12} parent=0 // pred_region
    _
  $region9: #{biomedclip_text_forward.12} parent=0 // pred_fallthru
    _
  // Predicated region
  $region10: #{biomedclip_text_forward.12} parent=0 // pred_check
    _
  $region11: #{biomedclip_text_forward.12} parent=0 // pred_check_branch
    %13 = sbr.rel (0) target = $region13
  $region12: #{biomedclip_text_forward.12} parent=0 // pred_region
    _
  $region13: #{biomedclip_text_forward.12} parent=0 // pred_fallthru
    _
  %v15 = vld [vmem:[%s0] sm:$0xf]
  %v16 = vld [vmem:[%s0 + $0x4] sm:$0xf]
  %v17 = vld [vmem:[%s1] sm:$0xf]
  %v18 = vld [vmem:[%s1 + $0x4] sm:$0xf]
  %v19 = vld [vmem:[%s1 + $0x8] sm:$0xf]
  %v20 = vld [vmem:[%s1 + $0xc] sm:$0xf]
  %v21 = vld [vmem:[%s2] sm:$0x1]
  %v23 = vlaneseq
  %v24 = vshrl.u32 %v23, 7
  %v25 = vsub.s32 0, %v24
  %v26 = vrot.slane %v21, %v25
  %v30 = vunpack.c.l.b16 %v15
  %v31 = vunpack.c.l.b16 %v16
  %v32 = vpack.c.b16 %v31, %v30
  %v37 = vunpack.c.l.b16 %v17
  %v38 = vunpack.c.l.b16 %v18
  %v39 = vunpack.c.l.b16 %v19
  %v40 = vunpack.c.l.b16 %v20
  %v41 = vpack.c.b16 %v38, %v37
  %v42 = vpack.c.b16 %v40, %v39
  %vm45 = vcmask 261120
  %v47 = vsel %vm45, %v32, 0
  %49 = vmatprep.subr.bf16.mxu0 0
  %50 = vmatpush1.bf16.msra.mxu0 %v41
  %51 = vmatprep.subr.bf16.mxu0 0
  %52 = vmatpush1.bf16.msra.mxu0 %v42
  %53 = vmatprep.subr.bf16.mxu0 0
  %54 = vmatpush1.bf16.msra.mxu0 0
  %55 = vmatprep.subr.bf16.mxu0 0
  %56 = vmatpush1.bf16.msra.mxu0 0
  %57 = vmatprep.subr.bf16.mxu0 0
  %58 = vmatpush1.bf16.msra.mxu0 0
  %59 = vmatprep.subr.bf16.mxu0 0
  %60 = vmatpush1.bf16.msra.mxu0 0
  %61 = vmatprep.subr.bf16.mxu0 0
  %62 = vmatpush1.bf16.msra.mxu0 0
  %63 = vmatprep.subr.bf16.mxu0 0
  %64 = vmatpush1.bf16.msra.mxu0 0
  %65 = vmatprep.subr.bf16.mxu0 0
  %66 = vmatpush1.bf16.msra.mxu0 0
  %67 = vmatprep.subr.bf16.mxu0 0
  %68 = vmatpush1.bf16.msra.mxu0 0
  %69 = vmatprep.subr.bf16.mxu0 0
  %70 = vmatpush1.bf16.msra.mxu0 0
  %71 = vmatprep.subr.bf16.mxu0 0
  %72 = vmatpush1.bf16.msra.mxu0 0
  %73 = vmatprep.subr.bf16.mxu0 0
  %74 = vmatpush1.bf16.msra.mxu0 0
  %75 = vmatprep.subr.bf16.mxu0 0
  %76 = vmatpush1.bf16.msra.mxu0 0
  %77 = vmatprep.subr.bf16.mxu0 0
  %78 = vmatpush1.bf16.msra.mxu0 0
  %79 = vmatprep.subr.bf16.mxu0 0
  %80 = vmatpush1.bf16.msra.mxu0 0
  %81 = vmatprep.mubr.bf16.mxu0 0
  %82 = vmatmul.mubr.bf16.gmra.mrb[0].mxu0 %v47
  %v83 = vpop.f32.mrb[0].mxu0
  %v84 = vadd.f32 %v26, %v83
  %v85 = vpop.f32.mrb[0].mxu0
  %v86 = vpop.f32.mrb[0].mxu0
  %v87 = vadd.f32 %v26, %v86
  %v88 = vpop.f32.mrb[0].mxu0
  %89 = vdwg.mxu0
  %v90 = vpack.c.bf16 %v87, %v84
  %v92 = vunpack.c.l.b16 %v90
  %v93 = vunpack.c.h.b16 %v90
  %v94 = vpack.c.b16 %v92, %v92
  %v95 = vpack.c.b16 %v93, %v93
  %vm98 = vcmask 781312
  %99 = vst.msk [vmem:[%s3] sm:$0xf] %vm98, %v94
  %100 = vst.msk [vmem:[%s3 + $0x4] sm:$0xf] %vm98, %v95
  // Predicated region
  $region14: #{biomedclip_text_forward.12} parent=0 // pred_check
    _
  $region15: #{biomedclip_text_forward.12} parent=0 // pred_check_branch
    %102 = sbr.rel (0) target = $region17
  $region16: #{biomedclip_text_forward.12} parent=0 // pred_region
    _
  $region17: #{biomedclip_text_forward.12} parent=0 // pred_fallthru
    _
  // Predicated region
  $region18: #{biomedclip_text_forward.12} parent=0 // pred_check
    _
  $region19: #{biomedclip_text_forward.12} parent=0 // pred_check_branch
    %104 = sbr.rel (0) target = $region21
  $region20: #{biomedclip_text_forward.12} parent=0 // pred_region
    _
  $region21: #{biomedclip_text_forward.12} parent=0 // pred_fallthru
    _

// kernel: biomedclip_text_forward.14
$region0: #{biomedclip_text_forward.14}
  #allocation0 [shape = 'u32[]', space=smem, size = 0x4, offset = 0x4, fixed_abs, tag = 'smem constant byte address 0x4 - core index']
  #allocation1 [shape = 'u32[144,128]{1,0:T(1,128)}', space=vmem, size = 0x12000, scoped, tag = 'internal scratch']
  %s0 = inlined_call_operand.vmem [shape: bf16[16,32], index: 0, kind: input, shape index: {}]
  %s1 = inlined_call_operand.vmem [shape: bf16[32,32], index: 1, kind: input, shape index: {}]
  %s2 = inlined_call_operand.vmem [shape: f32[1,32], index: 2, kind: input, shape index: {}]
  %s3 = inlined_call_operand.vmem [shape: bf16[16,32], index: 3, kind: input, shape index: {}]
  %s4 = inlined_call_operand.vmem [shape: f32[1,32], index: 4, kind: input, shape index: {}]
  %s5 = inlined_call_operand.vmem [shape: f32[1,32], index: 5, kind: input, shape index: {}]
  %s6 = inlined_call_operand.vmem [shape: bf16[16,32], index: 6, kind: output, shape index: {}]
  %s7 = sld [smem:[#allocation0]]
  $region57: #{biomedclip_text_forward.14} parent=0
    _
  %s9 = ssub.s32 1, %s7
  %s10 = scalar_select 0, %s9, %s7
  loop: start=0, step=1, limit=4
  $region2: #{biomedclip_text_forward.14} parent=0 // loop_pre_header
    _
  $region3: #{biomedclip_text_forward.14} parent=0 // loop_header
    %s12 = sphi 0, %s16
    %p13 = scmp.ge.s32.totalorder %s12, 4
    %s22 = sphi 0, %s24
    %s25 = sphi 0, %s22
    %s26 = sphi 0, %s25
    %s42 = sphi 0, %s26
    %s46 = sphi 0, %s46
    %s48 = sphi 0, %s46
    %s49 = sphi 0, %s48
    %s63 = sphi 0, %s49
    %s67 = sphi 0, %s67
    %s69 = sphi 0, %s67
    %s70 = sphi 0, %s69
    %s84 = sphi 0, %s70
    %s90 = sphi 0, %s92
    %s93 = sphi 0, %s90
    %s94 = sphi 0, %s93
    %s110 = sphi 0, %s94
    %s114 = sphi 0, %s114
    %s116 = sphi 0, %s114
    %s117 = sphi 0, %s116
    %s131 = sphi 0, %s117
    %s135 = sphi 0, %s135
    %s137 = sphi 0, %s135
    %s138 = sphi 0, %s137
    %s152 = sphi 0, %s138
    %s158 = sphi 0, %s160
    %s161 = sphi 0, %s158
    %s162 = sphi 0, %s161
    %s178 = sphi 0, %s162
  $region4: #{biomedclip_text_forward.14} parent=0 // loop_header_branch
    %15 = sbr.rel (%p13) target = $region8
  $region5: #{biomedclip_text_forward.14} parent=0 // loop_body
    %s17 = ssub.s32 %s12, 1
    %s18 = ssub.s32 %s12, 2
    %s19 = sadd.s32 %s12, 1
    %s20 = ssub.s32 %s12, %s19
    %p21 = scmp.eq.s32.totalorder %s20, 0
    %s23 = sadd.s32 %s22, 1
    %s24 = scalar_select %p21, %s22, %s23
    %p27 = pneg %p21
    %p28 = scmp.eq.s32.totalorder %s12, 1
    %p29 = por %p27, %p28
    %p30 = scmp.ne.s32.totalorder %s22, %s25
    %p31 = scmp.eq.s32.totalorder %s12, 0
    %p32 = por %p30, %p31
    %p33 = scmp.ne.s32.totalorder %s22, %s25
    %p34 = scmp.eq.s32.totalorder %s17, 1
    %p35 = por %p33, %p34
    %p36 = scmp.ne.s32.totalorder %s25, %s26
    %p37 = scmp.eq.s32.totalorder %s17, 0
    %p38 = por %p36, %p37
    %p39 = scmp.ne.s32.totalorder %s25, %s26
    %p40 = scmp.eq.s32.totalorder %s18, 1
    %p41 = por %p39, %p40
    %p43 = scmp.ne.s32.totalorder %s26, %s42
    %p44 = scmp.eq.s32.totalorder %s18, 0
    %p45 = por %p43, %p44
    %s47 = sadd.s32 %s46, 1
    %p50 = scmp.eq.s32.totalorder %s12, 1
    %p51 = scmp.ne.s32.totalorder %s46, %s48
    %p52 = scmp.eq.s32.totalorder %s12, 0
    %p53 = por %p51, %p52
    %p54 = scmp.ne.s32.totalorder %s46, %s48
    %p55 = scmp.eq.s32.totalorder %s17, 1
    %p56 = por %p54, %p55
    %p57 = scmp.ne.s32.totalorder %s48, %s49
    %p58 = scmp.eq.s32.totalorder %s17, 0
    %p59 = por %p57, %p58
    %p60 = scmp.ne.s32.totalorder %s48, %s49
    %p61 = scmp.eq.s32.totalorder %s18, 1
    %p62 = por %p60, %p61
    %p64 = scmp.ne.s32.totalorder %s49, %s63
    %p65 = scmp.eq.s32.totalorder %s18, 0
    %p66 = por %p64, %p65
    %s68 = sadd.s32 %s67, 1
    %p71 = scmp.eq.s32.totalorder %s12, 1
    %p72 = scmp.ne.s32.totalorder %s67, %s69
    %p73 = scmp.eq.s32.totalorder %s12, 0
    %p74 = por %p72, %p73
    %p75 = scmp.ne.s32.totalorder %s67, %s69
    %p76 = scmp.eq.s32.totalorder %s17, 1
    %p77 = por %p75, %p76
    %p78 = scmp.ne.s32.totalorder %s69, %s70
    %p79 = scmp.eq.s32.totalorder %s17, 0
    %p80 = por %p78, %p79
    %p81 = scmp.ne.s32.totalorder %s69, %s70
    %p82 = scmp.eq.s32.totalorder %s18, 1
    %p83 = por %p81, %p82
    %p85 = scmp.ne.s32.totalorder %s70, %s84
    %p86 = scmp.eq.s32.totalorder %s18, 0
    %p87 = por %p85, %p86
    %s88 = ssub.s32 %s12, %s19
    %p89 = scmp.eq.s32.totalorder %s88, 0
    %s91 = sadd.s32 %s90, 1
    %s92 = scalar_select %p89, %s90, %s91
    %p95 = pneg %p89
    %p96 = scmp.eq.s32.totalorder %s12, 1
    %p97 = por %p95, %p96
    %p98 = scmp.ne.s32.totalorder %s90, %s93
    %p99 = scmp.eq.s32.totalorder %s12, 0
    %p100 = por %p98, %p99
    %p101 = scmp.ne.s32.totalorder %s90, %s93
    %p102 = scmp.eq.s32.totalorder %s17, 1
    %p103 = por %p101, %p102
    %p104 = scmp.ne.s32.totalorder %s93, %s94
    %p105 = scmp.eq.s32.totalorder %s17, 0
    %p106 = por %p104, %p105
    %p107 = scmp.ne.s32.totalorder %s93, %s94
    %p108 = scmp.eq.s32.totalorder %s18, 1
    %p109 = por %p107, %p108
    %p111 = scmp.ne.s32.totalorder %s94, %s110
    %p112 = scmp.eq.s32.totalorder %s18, 0
    %p113 = por %p111, %p112
    %s115 = sadd.s32 %s114, 1
    %p118 = scmp.eq.s32.totalorder %s12, 1
    %p119 = scmp.ne.s32.totalorder %s114, %s116
    %p120 = scmp.eq.s32.totalorder %s12, 0
    %p121 = por %p119, %p120
    %p122 = scmp.ne.s32.totalorder %s114, %s116
    %p123 = scmp.eq.s32.totalorder %s17, 1
    %p124 = por %p122, %p123
    %p125 = scmp.ne.s32.totalorder %s116, %s117
    %p126 = scmp.eq.s32.totalorder %s17, 0
    %p127 = por %p125, %p126
    %p128 = scmp.ne.s32.totalorder %s116, %s117
    %p129 = scmp.eq.s32.totalorder %s18, 1
    %p130 = por %p128, %p129
    %p132 = scmp.ne.s32.totalorder %s117, %s131
    %p133 = scmp.eq.s32.totalorder %s18, 0
    %p134 = por %p132, %p133
    %s136 = sadd.s32 %s135, 1
    %p139 = scmp.eq.s32.totalorder %s12, 1
    %p140 = scmp.ne.s32.totalorder %s135, %s137
    %p141 = scmp.eq.s32.totalorder %s12, 0
    %p142 = por %p140, %p141
    %p143 = scmp.ne.s32.totalorder %s135, %s137
    %p144 = scmp.eq.s32.totalorder %s17, 1
    %p145 = por %p143, %p144
    %p146 = scmp.ne.s32.totalorder %s137, %s138
    %p147 = scmp.eq.s32.totalorder %s17, 0
    %p148 = por %p146, %p147
    %p149 = scmp.ne.s32.totalorder %s137, %s138
    %p150 = scmp.eq.s32.totalorder %s18, 1
    %p151 = por %p149, %p150
    %p153 = scmp.ne.s32.totalorder %s138, %s152
    %p154 = scmp.eq.s32.totalorder %s18, 0
    %p155 = por %p153, %p154
    %s156 = ssub.s32 %s12, %s19
    %p157 = scmp.eq.s32.totalorder %s156, 0
    %s159 = sadd.s32 %s158, 1
    %s160 = scalar_select %p157, %s158, %s159
    %p163 = pneg %p157
    %p164 = scmp.eq.s32.totalorder %s12, 1
    %p165 = por %p163, %p164
    %p166 = scmp.ne.s32.totalorder %s158, %s161
    %p167 = scmp.eq.s32.totalorder %s12, 0
    %p168 = por %p166, %p167
    %p169 = scmp.ne.s32.totalorder %s158, %s161
    %p170 = scmp.eq.s32.totalorder %s17, 1
    %p171 = por %p169, %p170
    %p172 = scmp.ne.s32.totalorder %s161, %s162
    %p173 = scmp.eq.s32.totalorder %s17, 0
    %p174 = por %p172, %p173
    %p175 = scmp.ne.s32.totalorder %s161, %s162
    %p176 = scmp.eq.s32.totalorder %s18, 1
    %p177 = por %p175, %p176
    %p179 = scmp.ne.s32.totalorder %s162, %s178
    %p180 = scmp.eq.s32.totalorder %s18, 0
    %p181 = por %p179, %p180
    %p182 = scmp.le.s32.totalorder 1, %s12
    %p183 = scmp.lt.s32.totalorder %s12, 3
    %p184 = pnand %p182, %p183
    %p185 = pneg %p184
    // Predicated region
    $region9: #{biomedclip_text_forward.14} parent=5 // pred_check
      _
    $region10: #{biomedclip_text_forward.14} parent=5 // pred_check_branch
      %187 = sbr.rel (%p184) target = $region12
    $region11: #{biomedclip_text_forward.14} parent=5 // pred_region
      %s188 = ssub.s32 %s12, 1
      // Predicated region
      $region13: #{biomedclip_text_forward.14} parent=11 // pred_check
        %p189 = pneg %p59
      $region14: #{biomedclip_text_forward.14} parent=11 // pred_check_branch
        %191 = sbr.rel (%p189) target = $region16
      $region15: #{biomedclip_text_forward.14} parent=11 // pred_region
        _
      $region16: #{biomedclip_text_forward.14} parent=11 // pred_fallthru
        _
      // Predicated region
      $region17: #{biomedclip_text_forward.14} parent=11 // pred_check
        %p192 = pneg %p80
      $region18: #{biomedclip_text_forward.14} parent=11 // pred_check_branch
        %194 = sbr.rel (%p192) target = $region20
      $region19: #{biomedclip_text_forward.14} parent=11 // pred_region
        _
      $region20: #{biomedclip_text_forward.14} parent=11 // pred_fallthru
        _
      // Predicated region
      $region21: #{biomedclip_text_forward.14} parent=11 // pred_check
        %p195 = pneg %p127
      $region22: #{biomedclip_text_forward.14} parent=11 // pred_check_branch
        %197 = sbr.rel (%p195) target = $region24
      $region23: #{biomedclip_text_forward.14} parent=11 // pred_region
        _
      $region24: #{biomedclip_text_forward.14} parent=11 // pred_fallthru
        _
      // Predicated region
      $region25: #{biomedclip_text_forward.14} parent=11 // pred_check
        %p198 = pneg %p148
      $region26: #{biomedclip_text_forward.14} parent=11 // pred_check_branch
        %200 = sbr.rel (%p198) target = $region28
      $region27: #{biomedclip_text_forward.14} parent=11 // pred_region
        _
      $region28: #{biomedclip_text_forward.14} parent=11 // pred_fallthru
        _
    $region12: #{biomedclip_text_forward.14} parent=5 // pred_fallthru
      _
    %p201 = scmp.lt.s32.totalorder %s12, 2
    // Predicated region
    $region29: #{biomedclip_text_forward.14} parent=5 // pred_check
      %p202 = pneg %p201
    $region30: #{biomedclip_text_forward.14} parent=5 // pred_check_branch
      %204 = sbr.rel (%p202) target = $region32
    $region31: #{biomedclip_text_forward.14} parent=5 // pred_region
      // Predicated region
      $region33: #{biomedclip_text_forward.14} parent=31 // pred_check
        %p205 = pneg %p32
      $region34: #{biomedclip_text_forward.14} parent=31 // pred_check_branch
        %207 = sbr.rel (%p205) target = $region36
      $region35: #{biomedclip_text_forward.14} parent=31 // pred_region
        %p208 = scmp.lt.s32.totalorder %s12, 1
        %s209 = scalar_select %p208, %s12, 1
        %s210 = smul.addr %s209, 4
        %s211 = scalar_lea.vmem %s0, %s210
      $region36: #{biomedclip_text_forward.14} parent=31 // pred_fallthru
        _
      // Predicated region
      $region37: #{biomedclip_text_forward.14} parent=31 // pred_check
        %p212 = pneg %p100
      $region38: #{biomedclip_text_forward.14} parent=31 // pred_check_branch
        %214 = sbr.rel (%p212) target = $region40
      $region39: #{biomedclip_text_forward.14} parent=31 // pred_region
        %p215 = scmp.lt.s32.totalorder %s12, 1
        %s216 = scalar_select %p215, %s12, 1
        %s217 = smul.addr %s216, 4
        %s218 = scalar_lea.vmem %s3, %s217
      $region40: #{biomedclip_text_forward.14} parent=31 // pred_fallthru
        _
    $region32: #{biomedclip_text_forward.14} parent=5 // pred_fallthru
      _
    %p219 = scmp.le.s32.totalorder 1, %s12
    %p220 = scmp.lt.s32.totalorder %s12, 3
    %p221 = pnand %p219, %p220
    %p222 = pneg %p221
    // Predicated region
    $region41: #{biomedclip_text_forward.14} parent=5 // pred_check
      _
    $region42: #{biomedclip_text_forward.14} parent=5 // pred_check_branch
      %224 = sbr.rel (%p221) target = $region44
    $region43: #{biomedclip_text_forward.14} parent=5 // pred_region
      %s225 = ssub.s32 %s12, 1
      %p226 = scmp.lt.s32.totalorder %s17, 1
      %s227 = scalar_select %p226, %s17, 1
      %s228 = smul.addr %s227, 4
      %s229 = scalar_lea.vmem %s0, %s228
      %p230 = pneg %p38
      %p231 = pneg %p35
      %p232 = pneg %p59
      %p233 = pneg %p56
      %p234 = pneg %p80
      %p235 = pneg %p77
      %p236 = scmp.lt.s32.totalorder %s17, 1
      %s237 = scalar_select %p236, %s17, 1
      %s238 = smul.addr %s237, 4
      %s239 = scalar_lea.vmem %s3, %s238
      %p240 = pneg %p106
      %p241 = pneg %p103
      %p242 = pneg %p127
      %p243 = pneg %p124
      %p244 = pneg %p148
      %p245 = pneg %p145
      %p246 = pneg %p174
      %p247 = pneg %p171
      %p248 = scmp.lt.s32.totalorder %s17, 1
      %s249 = scalar_select %p248, %s17, 1
      %s250 = smul.addr %s249, 4
      %s251 = scalar_lea.vmem %s6, %s250
      %p252 = scmp.lt.s32.totalorder %s17, 1
      %s253 = scalar_select %p252, %s17, 1
      %s254 = smul.addr %s253, 4
      %s255 = scalar_lea.vmem %s0, %s254
      %p256 = scmp.lt.s32.totalorder %s17, 1
      %s257 = scalar_select %p256, %s17, 1
      %s258 = smul.addr %s257, 4
      %s259 = scalar_lea.vmem %s3, %s258
      %p260 = scmp.lt.s32.totalorder %s17, 1
      %s261 = scalar_select %p260, %s17, 1
      %s262 = smul.addr %s261, 4
      %s263 = scalar_lea.vmem %s6, %s262
      %v265 = vld [vmem:[%s255] sm:$0xf]
      %v266 = vld [vmem:[%s1] sm:$0xf]
      %v267 = vld [vmem:[%s1 + $0x4] sm:$0xf]
      %v268 = vld [vmem:[%s1 + $0x8] sm:$0xf]
      %v269 = vld [vmem:[%s1 + $0xc] sm:$0xf]
      %v270 = vld [vmem:[%s2] sm:$0x1]
      %v272 = vlaneseq
      %v273 = vshrl.u32 %v272, 7
      %v274 = vsub.s32 0, %v273
      %v275 = vrot.slane %v270, %v274
      %v281 = vunpack.c.l.b16 %v266
      %v282 = vunpack.c.l.b16 %v267
      %v283 = vunpack.c.l.b16 %v268
      %v284 = vunpack.c.l.b16 %v269
      %v285 = vpack.c.b16 %v282, %v281
      %v286 = vpack.c.b16 %v284, %v283
      %vm289 = vcmask 261120
      %v291 = vsel %vm289, %v265, 0
      %293 = vmatprep.subr.bf16.mxu0 0
      %294 = vmatpush1.bf16.msra.mxu0 %v285
      %295 = vmatprep.subr.bf16.mxu0 0
      %296 = vmatpush1.bf16.msra.mxu0 %v286
      %297 = vmatprep.subr.bf16.mxu0 0
      %298 = vmatpush1.bf16.msra.mxu0 0
      %299 = vmatprep.subr.bf16.mxu0 0
      %300 = vmatpush1.bf16.msra.mxu0 0
      %301 = vmatprep.subr.bf16.mxu0 0
      %302 = vmatpush1.bf16.msra.mxu0 0
      %303 = vmatprep.subr.bf16.mxu0 0
      %304 = vmatpush1.bf16.msra.mxu0 0
      %305 = vmatprep.subr.bf16.mxu0 0
      %306 = vmatpush1.bf16.msra.mxu0 0
      %307 = vmatprep.subr.bf16.mxu0 0
      %308 = vmatpush1.bf16.msra.mxu0 0
      %309 = vmatprep.subr.bf16.mxu0 0
      %310 = vmatpush1.bf16.msra.mxu0 0
      %311 = vmatprep.subr.bf16.mxu0 0
      %312 = vmatpush1.bf16.msra.mxu0 0
      %313 = vmatprep.subr.bf16.mxu0 0
      %314 = vmatpush1.bf16.msra.mxu0 0
      %315 = vmatprep.subr.bf16.mxu0 0
      %316 = vmatpush1.bf16.msra.mxu0 0
      %317 = vmatprep.subr.bf16.mxu0 0
      %318 = vmatpush1.bf16.msra.mxu0 0
      %319 = vmatprep.subr.bf16.mxu0 0
      %320 = vmatpush1.bf16.msra.mxu0 0
      %321 = vmatprep.subr.bf16.mxu0 0
      %322 = vmatpush1.bf16.msra.mxu0 0
      %323 = vmatprep.subr.bf16.mxu0 0
      %324 = vmatpush1.bf16.msra.mxu0 0
      %325 = vmatprep.mubr.bf16.mxu0 0
      %326 = vmatmul.mubr.bf16.gmra.mrb[0].mxu0 %v291
      %v327 = vpop.f32.mrb[0].mxu0
      %v328 = vadd.f32 %v275, %v327
      %v329 = vpop.f32.mrb[0].mxu0
      %v330 = vpop.f32.mrb[0].mxu0
      %v331 = vpop.f32.mrb[0].mxu0
      %332 = vdwg.mxu0
      %v333 = vld [vmem:[%s259] sm:$0xf]
      %v334 = vunpack.c.l.bf16 %v333
      %v335 = vadd.f32 %v328, %v334
      %v336 = vsel %vm289, %v335, 0.0
      %337 = vadd.xlane.f32.xlu0 %v336
      %v338 = vpop.xlane.xlu0 %337
      %v339 = vrcp.pop 32.0
      %v340 = vmul.f32 %v338, %v339
      %v341 = vsub.f32 %v335, %v340
      %v342 = vmul.f32 %v341, %v341
      %v343 = vsel %vm289, %v342, 0.0
      %344 = vadd.xlane.f32.xlu0 %v343
      %v345 = vpop.xlane.xlu0 %344
      %v346 = vmul.f32 %v345, %v339
      %v347 = vadd.f32 %v346, 1e-12
      %v348 = vrsqrt.pop %v347
      %v349 = vmul.f32 %v341, %v348
      %v350 = vld [vmem:[%s4] sm:$0x1]
      %v352 = vlaneseq
      %v353 = vshrl.u32 %v352, 7
      %v354 = vsub.s32 0, %v353
      %v355 = vrot.slane %v350, %v354
      %v357 = vmul.f32 %v349, %v355
      %v358 = vld [vmem:[%s5] sm:$0x1]
      %v360 = vlaneseq
      %v361 = vshrl.u32 %v360, 7
      %v362 = vsub.s32 0, %v361
      %v363 = vrot.slane %v358, %v362
      %v365 = vadd.f32 %v357, %v363
      %v366 = vpack.c.bf16 %v365, %v365
      %vm367 = vcmask 257024
      %368 = vst.msk [vmem:[%s263] sm:$0xf] %vm367, %v366
      %p369 = scmp.lt.s32.totalorder %s17, 1
      %s370 = scalar_select %p369, %s17, 1
      %s371 = smul.addr %s370, 4
      %s372 = scalar_lea.vmem %s6, %s371
      // Predicated region
      $region45: #{biomedclip_text_forward.14} parent=43 // pred_check
        %p373 = pneg %p171
      $region46: #{biomedclip_text_forward.14} parent=43 // pred_check_branch
        %375 = sbr.rel (%p373) target = $region48
      $region47: #{biomedclip_text_forward.14} parent=43 // pred_region
        _
      $region48: #{biomedclip_text_forward.14} parent=43 // pred_fallthru
        _
    $region44: #{biomedclip_text_forward.14} parent=5 // pred_fallthru
      _
    %p376 = scmp.le.s32.totalorder 2, %s12
    // Predicated region
    $region49: #{biomedclip_text_forward.14} parent=5 // pred_check
      %p377 = pneg %p376
    $region50: #{biomedclip_text_forward.14} parent=5 // pred_check_branch
      %379 = sbr.rel (%p377) target = $region52
    $region51: #{biomedclip_text_forward.14} parent=5 // pred_region
      %s380 = ssub.s32 %s12, 2
      // Predicated region
      $region53: #{biomedclip_text_forward.14} parent=51 // pred_check
        %p381 = pneg %p177
      $region54: #{biomedclip_text_forward.14} parent=51 // pred_check_branch
        %383 = sbr.rel (%p381) target = $region56
      $region55: #{biomedclip_text_forward.14} parent=51 // pred_region
        %p384 = scmp.lt.s32.totalorder %s18, 1
        %s385 = scalar_select %p384, %s18, 1
        %s386 = smul.addr %s385, 4
        %s387 = scalar_lea.vmem %s6, %s386
      $region56: #{biomedclip_text_forward.14} parent=51 // pred_fallthru
        _
    $region52: #{biomedclip_text_forward.14} parent=5 // pred_fallthru
      _
  $region6: #{biomedclip_text_forward.14} parent=0 // loop_footer
    %s16 = sadd.s32 1, %s12
  $region7: #{biomedclip_text_forward.14} parent=0 // loop_footer_branch
    %11 = sbr.rel target = $region3
  $region8: #{biomedclip_text_forward.14} parent=0 // loop_exit
    _

// kernel: biomedclip_text_forward.11
$region0: #{biomedclip_text_forward.11}
  #allocation0 [shape = 'u32[]', space=smem, size = 0x4, offset = 0x4, fixed_abs, tag = 'smem constant byte address 0x4 - core index']
  #allocation1 [shape = 'u32[144,128]{1,0:T(1,128)}', space=vmem, size = 0x12000, scoped, tag = 'internal scratch']
  %s0 = inlined_call_operand.vmem [shape: f32[16,32], index: 0, kind: input, shape index: {}]
  %s1 = inlined_call_operand.vmem [shape: f32[1,32], index: 1, kind: input, shape index: {}]
  %s2 = inlined_call_operand.vmem [shape: f32[1,32], index: 2, kind: input, shape index: {}]
  %s3 = inlined_call_operand.vmem [shape: bf16[16,32], index: 3, kind: output, shape index: {}]
  %s4 = sld [smem:[#allocation0]]
  $region45: #{biomedclip_text_forward.11} parent=0
    _
  %s6 = ssub.s32 1, %s4
  %s7 = scalar_select 0, %s6, %s4
  loop: start=0, step=1, limit=4
  $region2: #{biomedclip_text_forward.11} parent=0 // loop_pre_header
    _
  $region3: #{biomedclip_text_forward.11} parent=0 // loop_header
    %s9 = sphi 0, %s13
    %p10 = scmp.ge.s32.totalorder %s9, 4
    %s19 = sphi 0, %s21
    %s22 = sphi 0, %s19
    %s23 = sphi 0, %s22
    %s39 = sphi 0, %s23
    %s43 = sphi 0, %s43
    %s45 = sphi 0, %s43
    %s46 = sphi 0, %s45
    %s60 = sphi 0, %s46
    %s64 = sphi 0, %s64
    %s66 = sphi 0, %s64
    %s67 = sphi 0, %s66
    %s81 = sphi 0, %s67
    %s87 = sphi 0, %s89
    %s90 = sphi 0, %s87
    %s91 = sphi 0, %s90
    %s107 = sphi 0, %s91
  $region4: #{biomedclip_text_forward.11} parent=0 // loop_header_branch
    %12 = sbr.rel (%p10) target = $region8
  $region5: #{biomedclip_text_forward.11} parent=0 // loop_body
    %s14 = ssub.s32 %s9, 1
    %s15 = ssub.s32 %s9, 2
    %s16 = sadd.s32 %s9, 1
    %s17 = ssub.s32 %s9, %s16
    %p18 = scmp.eq.s32.totalorder %s17, 0
    %s20 = sadd.s32 %s19, 1
    %s21 = scalar_select %p18, %s19, %s20
    %p24 = pneg %p18
    %p25 = scmp.eq.s32.totalorder %s9, 1
    %p26 = por %p24, %p25
    %p27 = scmp.ne.s32.totalorder %s19, %s22
    %p28 = scmp.eq.s32.totalorder %s9, 0
    %p29 = por %p27, %p28
    %p30 = scmp.ne.s32.totalorder %s19, %s22
    %p31 = scmp.eq.s32.totalorder %s14, 1
    %p32 = por %p30, %p31
    %p33 = scmp.ne.s32.totalorder %s22, %s23
    %p34 = scmp.eq.s32.totalorder %s14, 0
    %p35 = por %p33, %p34
    %p36 = scmp.ne.s32.totalorder %s22, %s23
    %p37 = scmp.eq.s32.totalorder %s15, 1
    %p38 = por %p36, %p37
    %p40 = scmp.ne.s32.totalorder %s23, %s39
    %p41 = scmp.eq.s32.totalorder %s15, 0
    %p42 = por %p40, %p41
    %s44 = sadd.s32 %s43, 1
    %p47 = scmp.eq.s32.totalorder %s9, 1
    %p48 = scmp.ne.s32.totalorder %s43, %s45
    %p49 = scmp.eq.s32.totalorder %s9, 0
    %p50 = por %p48, %p49
    %p51 = scmp.ne.s32.totalorder %s43, %s45
    %p52 = scmp.eq.s32.totalorder %s14, 1
    %p53 = por %p51, %p52
    %p54 = scmp.ne.s32.totalorder %s45, %s46
    %p55 = scmp.eq.s32.totalorder %s14, 0
    %p56 = por %p54, %p55
    %p57 = scmp.ne.s32.totalorder %s45, %s46
    %p58 = scmp.eq.s32.totalorder %s15, 1
    %p59 = por %p57, %p58
    %p61 = scmp.ne.s32.totalorder %s46, %s60
    %p62 = scmp.eq.s32.totalorder %s15, 0
    %p63 = por %p61, %p62
    %s65 = sadd.s32 %s64, 1
    %p68 = scmp.eq.s32.totalorder %s9, 1
    %p69 = scmp.ne.s32.totalorder %s64, %s66
    %p70 = scmp.eq.s32.totalorder %s9, 0
    %p71 = por %p69, %p70
    %p72 = scmp.ne.s32.totalorder %s64, %s66
    %p73 = scmp.eq.s32.totalorder %s14, 1
    %p74 = por %p72, %p73
    %p75 = scmp.ne.s32.totalorder %s66, %s67
    %p76 = scmp.eq.s32.totalorder %s14, 0
    %p77 = por %p75, %p76
    %p78 = scmp.ne.s32.totalorder %s66, %s67
    %p79 = scmp.eq.s32.totalorder %s15, 1
    %p80 = por %p78, %p79
    %p82 = scmp.ne.s32.totalorder %s67, %s81
    %p83 = scmp.eq.s32.totalorder %s15, 0
    %p84 = por %p82, %p83
    %s85 = ssub.s32 %s9, %s16
    %p86 = scmp.eq.s32.totalorder %s85, 0
    %s88 = sadd.s32 %s87, 1
    %s89 = scalar_select %p86, %s87, %s88
    %p92 = pneg %p86
    %p93 = scmp.eq.s32.totalorder %s9, 1
    %p94 = por %p92, %p93
    %p95 = scmp.ne.s32.totalorder %s87, %s90
    %p96 = scmp.eq.s32.totalorder %s9, 0
    %p97 = por %p95, %p96
    %p98 = scmp.ne.s32.totalorder %s87, %s90
    %p99 = scmp.eq.s32.totalorder %s14, 1
    %p100 = por %p98, %p99
    %p101 = scmp.ne.s32.totalorder %s90, %s91
    %p102 = scmp.eq.s32.totalorder %s14, 0
    %p103 = por %p101, %p102
    %p104 = scmp.ne.s32.totalorder %s90, %s91
    %p105 = scmp.eq.s32.totalorder %s15, 1
    %p106 = por %p104, %p105
    %p108 = scmp.ne.s32.totalorder %s91, %s107
    %p109 = scmp.eq.s32.totalorder %s15, 0
    %p110 = por %p108, %p109
    %p111 = scmp.le.s32.totalorder 1, %s9
    %p112 = scmp.lt.s32.totalorder %s9, 3
    %p113 = pnand %p111, %p112
    %p114 = pneg %p113
    // Predicated region
    $region9: #{biomedclip_text_forward.11} parent=5 // pred_check
      _
    $region10: #{biomedclip_text_forward.11} parent=5 // pred_check_branch
      %116 = sbr.rel (%p113) target = $region12
    $region11: #{biomedclip_text_forward.11} parent=5 // pred_region
      %s117 = ssub.s32 %s9, 1
      // Predicated region
      $region13: #{biomedclip_text_forward.11} parent=11 // pred_check
        %p118 = pneg %p56
      $region14: #{biomedclip_text_forward.11} parent=11 // pred_check_branch
        %120 = sbr.rel (%p118) target = $region16
      $region15: #{biomedclip_text_forward.11} parent=11 // pred_region
        _
      $region16: #{biomedclip_text_forward.11} parent=11 // pred_fallthru
        _
      // Predicated region
      $region17: #{biomedclip_text_forward.11} parent=11 // pred_check
        %p121 = pneg %p77
      $region18: #{biomedclip_text_forward.11} parent=11 // pred_check_branch
        %123 = sbr.rel (%p121) target = $region20
      $region19: #{biomedclip_text_forward.11} parent=11 // pred_region
        _
      $region20: #{biomedclip_text_forward.11} parent=11 // pred_fallthru
        _
    $region12: #{biomedclip_text_forward.11} parent=5 // pred_fallthru
      _
    %p124 = scmp.lt.s32.totalorder %s9, 2
    // Predicated region
    $region21: #{biomedclip_text_forward.11} parent=5 // pred_check
      %p125 = pneg %p124
    $region22: #{biomedclip_text_forward.11} parent=5 // pred_check_branch
      %127 = sbr.rel (%p125) target = $region24
    $region23: #{biomedclip_text_forward.11} parent=5 // pred_region
      // Predicated region
      $region25: #{biomedclip_text_forward.11} parent=23 // pred_check
        %p128 = pneg %p29
      $region26: #{biomedclip_text_forward.11} parent=23 // pred_check_branch
        %130 = sbr.rel (%p128) target = $region28
      $region27: #{biomedclip_text_forward.11} parent=23 // pred_region
        %p131 = scmp.lt.s32.totalorder %s9, 1
        %s132 = scalar_select %p131, %s9, 1
        %s133 = smul.addr %s132, 8
        %s134 = scalar_lea.vmem %s0, %s133
      $region28: #{biomedclip_text_forward.11} parent=23 // pred_fallthru
        _
    $region24: #{biomedclip_text_forward.11} parent=5 // pred_fallthru
      _
    %p135 = scmp.le.s32.totalorder 1, %s9
    %p136 = scmp.lt.s32.totalorder %s9, 3
    %p137 = pnand %p135, %p136
    %p138 = pneg %p137
    // Predicated region
    $region29: #{biomedclip_text_forward.11} parent=5 // pred_check
      _
    $region30: #{biomedclip_text_forward.11} parent=5 // pred_check_branch
      %140 = sbr.rel (%p137) target = $region32
    $region31: #{biomedclip_text_forward.11} parent=5 // pred_region
      %s141 = ssub.s32 %s9, 1
      %p142 = scmp.lt.s32.totalorder %s14, 1
      %s143 = scalar_select %p142, %s14, 1
      %s144 = smul.addr %s143, 8
      %s145 = scalar_lea.vmem %s0, %s144
      %p146 = pneg %p35
      %p147 = pneg %p32
      %p148 = pneg %p56
      %p149 = pneg %p53
      %p150 = pneg %p77
      %p151 = pneg %p74
      %p152 = pneg %p103
      %p153 = pneg %p100
      %p154 = scmp.lt.s32.totalorder %s14, 1
      %s155 = scalar_select %p154, %s14, 1
      %s156 = smul.addr %s155, 4
      %s157 = scalar_lea.vmem %s3, %s156
      %p158 = scmp.lt.s32.totalorder %s14, 1
      %s159 = scalar_select %p158, %s14, 1
      %s160 = smul.addr %s159, 8
      %s161 = scalar_lea.vmem %s0, %s160
      %p162 = scmp.lt.s32.totalorder %s14, 1
      %s163 = scalar_select %p162, %s14, 1
      %s164 = smul.addr %s163, 4
      %s165 = scalar_lea.vmem %s3, %s164
      %v166 = vld [vmem:[%s161] sm:$0xff]
      %vm167 = vcmask 261120
      %v168 = vsel %vm167, %v166, 0.0
      %169 = vadd.xlane.f32.xlu0 %v168
      %v170 = vpop.xlane.xlu0 %169
      %v171 = vrcp.pop 32.0
      %v172 = vmul.f32 %v170, %v171
      %v173 = vsub.f32 %v166, %v172
      %v174 = vmul.f32 %v173, %v173
      %v175 = vsel %vm167, %v174, 0.0
      %176 = vadd.xlane.f32.xlu0 %v175
      %v177 = vpop.xlane.xlu0 %176
      %v178 = vmul.f32 %v177, %v171
      %v179 = vadd.f32 %v178, 1e-12
      %v180 = vrsqrt.pop %v179
      %v181 = vmul.f32 %v173, %v180
      %v182 = vld [vmem:[%s1] sm:$0x1]
      %v184 = vlaneseq
      %v185 = vshrl.u32 %v184, 7
      %v186 = vsub.s32 0, %v185
      %v187 = vrot.slane %v182, %v186
      %v189 = vmul.f32 %v181, %v187
      %v190 = vld [vmem:[%s2] sm:$0x1]
      %v192 = vlaneseq
      %v193 = vshrl.u32 %v192, 7
      %v194 = vsub.s32 0, %v193
      %v195 = vrot.slane %v190, %v194
      %v197 = vadd.f32 %v189, %v195
      %v198 = vpack.c.bf16 %v197, %v197
      %vm199 = vcmask 257024
      %200 = vst.msk [vmem:[%s165] sm:$0xf] %vm199, %v198
      %p201 = scmp.lt.s32.totalorder %s14, 1
      %s202 = scalar_select %p201, %s14, 1
      %s203 = smul.addr %s202, 4
      %s204 = scalar_lea.vmem %s3, %s203
      // Predicated region
      $region33: #{biomedclip_text_forward.11} parent=31 // pred_check
        %p205 = pneg %p100
      $region34: #{biomedclip_text_forward.11} parent=31 // pred_check_branch
        %207 = sbr.rel (%p205) target = $region36
      $region35: #{biomedclip_text_forward.11} parent=31 // pred_region
        _
      $region36: #{biomedclip_text_forward.11} parent=31 // pred_fallthru
        _
    $region32: #{biomedclip_text_forward.11} parent=5 // pred_fallthru
      _
    %p208 = scmp.le.s32.totalorder 2, %s9
    // Predicated region
    $region37: #{biomedclip_text_forward.11} parent=5 // pred_check
      %p209 = pneg %p208
    $region38: #{biomedclip_text_forward.11} parent=5 // pred_check_branch
      %211 = sbr.rel (%p209) target = $region40
    $region39: #{biomedclip_text_forward.11} parent=5 // pred_region
      %s212 = ssub.s32 %s9, 2
      // Predicated region
      $region41: #{biomedclip_text_forward.11} parent=39 // pred_check
        %p213 = pneg %p106
      $region42: #{biomedclip_text_forward.11} parent=39 // pred_check_branch
        %215 = sbr.rel (%p213) target = $region44
      $region43: #{biomedclip_text_forward.11} parent=39 // pred_region
        %p216 = scmp.lt.s32.totalorder %s15, 1
        %s217 = scalar_select %p216, %s15, 1
        %s218 = smul.addr %s217, 4
        %s219 = scalar_lea.vmem %s3, %s218
      $region44: #{biomedclip_text_forward.11} parent=39 // pred_fallthru
        _
    $region40: #{biomedclip_text_forward.11} parent=5 // pred_fallthru
      _
  $region6: #{biomedclip_text_forward.11} parent=0 // loop_footer
    %s13 = sadd.s32 1, %s9
  $region7: #{biomedclip_text_forward.11} parent=0 // loop_footer_branch
    %8 = sbr.rel target = $region3
  $region8: #{biomedclip_text_forward.11} parent=0 // loop_exit
    _

// kernel: biomedclip_text_forward.13
$region0: #{biomedclip_text_forward.13}
  #allocation0 [shape = 'u32[]', space=smem, size = 0x4, offset = 0x4, fixed_abs, tag = 'smem constant byte address 0x4 - core index']
  #allocation1 [shape = 'u32[144,128]{1,0:T(1,128)}', space=vmem, size = 0x12000, scoped, tag = 'internal scratch']
  %s0 = inlined_call_operand.vmem [shape: bf16[1,2,8,96], index: 0, kind: input, shape index: {}]
  %s1 = inlined_call_operand.vmem [shape: bf16[2,8,32], index: 1, kind: output, shape index: {}]
  %s2 = sld [smem:[#allocation0]]
  $region37: #{biomedclip_text_forward.13} parent=0
    _
  %s4 = ssub.s32 1, %s2
  %s5 = scalar_select 0, %s4, %s2
  loop: start=0, step=1, limit=4
  $region2: #{biomedclip_text_forward.13} parent=0 // loop_pre_header
    _
  $region3: #{biomedclip_text_forward.13} parent=0 // loop_header
    %s7 = sphi 0, %s11
    %p8 = scmp.ge.s32.totalorder %s7, 4
    %s14 = sphi 0, %s26
    %s15 = sphi 0, %s22
    %s16 = sphi 0, %s14
    %s17 = sphi 0, %s15
    %s18 = sphi 0, %s16
    %s19 = sphi 0, %s17
    %s31 = sphi 0, %s33
    %s34 = sphi 0, %s31
    %s35 = sphi 0, %s34
    %s51 = sphi 0, %s35
    %s59 = sphi 0, %s61
    %s62 = sphi 0, %s59
    %s63 = sphi 0, %s62
    %s79 = sphi 0, %s63
  $region4: #{biomedclip_text_forward.13} parent=0 // loop_header_branch
    %10 = sbr.rel (%p8) target = $region8
  $region5: #{biomedclip_text_forward.13} parent=0 // loop_body
    %s12 = ssub.s32 %s7, 1
    %s13 = ssub.s32 %s7, 2
    %s20 = sadd.s32 1, %s15
    %p21 = scmp.ge.s32.totalorder %s20, 1
    %s22 = scalar_select %p21, 0, %s20
    %s23 = sadd.s32 1, %s14
    %s24 = scalar_select %p21, %s23, %s14
    %p25 = scmp.ge.s32.totalorder %s24, 2
    %s26 = scalar_select %p25, 0, %s24
    %s27 = ssub.s32 %s15, %s22
    %s28 = ssub.s32 %s14, %s26
    %s29 = sor.u32 %s27, %s28
    %p30 = scmp.eq.s32.totalorder %s29, 0
    %s32 = sadd.s32 %s31, 1
    %s33 = scalar_select %p30, %s31, %s32
    %p36 = pneg %p30
    %p37 = scmp.eq.s32.totalorder %s7, 1
    %p38 = por %p36, %p37
    %p39 = scmp.ne.s32.totalorder %s31, %s34
    %p40 = scmp.eq.s32.totalorder %s7, 0
    %p41 = por %p39, %p40
    %p42 = scmp.ne.s32.totalorder %s31, %s34
    %p43 = scmp.eq.s32.totalorder %s12, 1
    %p44 = por %p42, %p43
    %p45 = scmp.ne.s32.totalorder %s34, %s35
    %p46 = scmp.eq.s32.totalorder %s12, 0
    %p47 = por %p45, %p46
    %p48 = scmp.ne.s32.totalorder %s34, %s35
    %p49 = scmp.eq.s32.totalorder %s13, 1
    %p50 = por %p48, %p49
    %p52 = scmp.ne.s32.totalorder %s35, %s51
    %p53 = scmp.eq.s32.totalorder %s13, 0
    %p54 = por %p52, %p53
    %s55 = ssub.s32 %s14, %s26
    %s56 = ssub.s32 %s15, %s22
    %s57 = sor.u32 %s55, %s56
    %p58 = scmp.eq.s32.totalorder %s57, 0
    %s60 = sadd.s32 %s59, 1
    %s61 = scalar_select %p58, %s59, %s60
    %p64 = pneg %p58
    %p65 = scmp.eq.s32.totalorder %s7, 1
    %p66 = por %p64, %p65
    %p67 = scmp.ne.s32.totalorder %s59, %s62
    %p68 = scmp.eq.s32.totalorder %s7, 0
    %p69 = por %p67, %p68
    %p70 = scmp.ne.s32.totalorder %s59, %s62
    %p71 = scmp.eq.s32.totalorder %s12, 1
    %p72 = por %p70, %p71
    %p73 = scmp.ne.s32.totalorder %s62, %s63
    %p74 = scmp.eq.s32.totalorder %s12, 0
    %p75 = por %p73, %p74
    %p76 = scmp.ne.s32.totalorder %s62, %s63
    %p77 = scmp.eq.s32.totalorder %s13, 1
    %p78 = por %p76, %p77
    %p80 = scmp.ne.s32.totalorder %s63, %s79
    %p81 = scmp.eq.s32.totalorder %s13, 0
    %p82 = por %p80, %p81
    %p83 = scmp.le.s32.totalorder 1, %s7
    %p84 = scmp.lt.s32.totalorder %s7, 3
    %p85 = pnand %p83, %p84
    %p86 = pneg %p85
    // Predicated region
    $region9: #{biomedclip_text_forward.13} parent=5 // pred_check
      _
    $region10: #{biomedclip_text_forward.13} parent=5 // pred_check_branch
      %88 = sbr.rel (%p85) target = $region12
    $region11: #{biomedclip_text_forward.13} parent=5 // pred_region
      %s89 = ssub.s32 %s7, 1
    $region12: #{biomedclip_text_forward.13} parent=5 // pred_fallthru
      _
    %p90 = scmp.lt.s32.totalorder %s7, 2
    // Predicated region
    $region13: #{biomedclip_text_forward.13} parent=5 // pred_check
      %p91 = pneg %p90
    $region14: #{biomedclip_text_forward.13} parent=5 // pred_check_branch
      %93 = sbr.rel (%p91) target = $region16
    $region15: #{biomedclip_text_forward.13} parent=5 // pred_region
      // Predicated region
      $region17: #{biomedclip_text_forward.13} parent=15 // pred_check
        %p94 = pneg %p41
      $region18: #{biomedclip_text_forward.13} parent=15 // pred_check_branch
        %96 = sbr.rel (%p94) target = $region20
      $region19: #{biomedclip_text_forward.13} parent=15 // pred_region
        %p97 = scmp.lt.s32.totalorder %s15, 0
        %s98 = scalar_select %p97, %s15, 0
        %p99 = scmp.lt.s32.totalorder %s14, 1
        %s100 = scalar_select %p99, %s14, 1
        %s101 = smul.addr %s98, 2
        %s102 = sadd.s32 %s100, %s101
        %s103 = smul.addr %s102, 4
        %s104 = scalar_lea.vmem %s0, %s103
      $region20: #{biomedclip_text_forward.13} parent=15 // pred_fallthru
        _
    $region16: #{biomedclip_text_forward.13} parent=5 // pred_fallthru
      _
    %p105 = scmp.le.s32.totalorder 1, %s7
    %p106 = scmp.lt.s32.totalorder %s7, 3
    %p107 = pnand %p105, %p106
    %p108 = pneg %p107
    // Predicated region
    $region21: #{biomedclip_text_forward.13} parent=5 // pred_check
      _
    $region22: #{biomedclip_text_forward.13} parent=5 // pred_check_branch
      %110 = sbr.rel (%p107) target = $region24
    $region23: #{biomedclip_text_forward.13} parent=5 // pred_region
      %s111 = ssub.s32 %s7, 1
      %p112 = scmp.lt.s32.totalorder %s17, 0
      %s113 = scalar_select %p112, %s17, 0
      %p114 = scmp.lt.s32.totalorder %s16, 1
      %s115 = scalar_select %p114, %s16, 1
      %s116 = smul.addr %s113, 2
      %s117 = sadd.s32 %s115, %s116
      %s118 = smul.addr %s117, 4
      %s119 = scalar_lea.vmem %s0, %s118
      %p120 = pneg %p47
      %p121 = pneg %p44
      %p122 = pneg %p75
      %p123 = pneg %p72
      %p124 = scmp.lt.s32.totalorder %s16, 1
      %s125 = scalar_select %p124, %s16, 1
      %p126 = scmp.lt.s32.totalorder %s17, 0
      %s127 = scalar_select %p126, %s17, 0
      %s128 = sadd.s32 %s127, %s125
      %s129 = smul.addr %s128, 4
      %s130 = scalar_lea.vmem %s1, %s129
      %p131 = scmp.lt.s32.totalorder %s17, 0
      %s132 = scalar_select %p131, %s17, 0
      %p133 = scmp.lt.s32.totalorder %s16, 1
      %s134 = scalar_select %p133, %s16, 1
      %s135 = smul.addr %s132, 2
      %s136 = sadd.s32 %s134, %s135
      %s137 = smul.addr %s136, 4
      %s138 = scalar_lea.vmem %s0, %s137
      %p139 = scmp.lt.s32.totalorder %s16, 1
      %s140 = scalar_select %p139, %s16, 1
      %p141 = scmp.lt.s32.totalorder %s17, 0
      %s142 = scalar_select %p141, %s17, 0
      %s143 = sadd.s32 %s142, %s140
      %s144 = smul.addr %s143, 4
      %s145 = scalar_lea.vmem %s1, %s144
      %v147 = vld [vmem:[%s138] sm:$0xf]
      %v149 = vunpack.c.l.b16 %v147
      %v150 = vpack.c.b16 %v149, %v149
      %151 = vrot.lane.b32.xlu0 %v150, 96
      %v152 = vpop.permute.xlu0 %151
      %vm153 = vcmask 64512
      %v155 = vsel %vm153, %v147, 0
      %v158 = vsel %vm153, %v152, 0
      %160 = vmatprep.subr.bf16.mxu0 0
      %161 = vmatpush1.bf16.xpose.msra.mxu0 %v158
      %162 = vmatprep.subr.bf16.mxu0 0
      %163 = vmatpush1.bf16.xpose.msra.mxu0 0
      %164 = vmatprep.subr.bf16.mxu0 0
      %165 = vmatpush1.bf16.xpose.msra.mxu0 0
      %166 = vmatprep.subr.bf16.mxu0 0
      %167 = vmatpush1.bf16.xpose.msra.mxu0 0
      %168 = vmatprep.subr.bf16.mxu0 0
      %169 = vmatpush1.bf16.xpose.msra.mxu0 0
      %170 = vmatprep.subr.bf16.mxu0 0
      %171 = vmatpush1.bf16.xpose.msra.mxu0 0
      %172 = vmatprep.subr.bf16.mxu0 0
      %173 = vmatpush1.bf16.xpose.msra.mxu0 0
      %174 = vmatprep.subr.bf16.mxu0 0
      %175 = vmatpush1.bf16.xpose.msra.mxu0 0
      %176 = vmatprep.subr.bf16.mxu0 0
      %177 = vmatpush1.bf16.xpose.msra.mxu0 0
      %178 = vmatprep.subr.bf16.mxu0 0
      %179 = vmatpush1.bf16.xpose.msra.mxu0 0
      %180 = vmatprep.subr.bf16.mxu0 0
      %181 = vmatpush1.bf16.xpose.msra.mxu0 0
      %182 = vmatprep.subr.bf16.mxu0 0
      %183 = vmatpush1.bf16.xpose.msra.mxu0 0
      %184 = vmatprep.subr.bf16.mxu0 0
      %185 = vmatpush1.bf16.xpose.msra.mxu0 0
      %186 = vmatprep.subr.bf16.mxu0 0
      %187 = vmatpush1.bf16.xpose.msra.mxu0 0
      %188 = vmatprep.subr.bf16.mxu0 0
      %189 = vmatpush1.bf16.xpose.msra.mxu0 0
      %190 = vmatprep.subr.bf16.mxu0 0
      %191 = vmatpush1.bf16.xpose.msra.mxu0 0
      %192 = vmatprep.mubr.bf16.mxu0 0
      %193 = vmatmul.mubr.bf16.gmra.mrb[0].mxu0 %v155
      %v194 = vpop.f32.mrb[0].mxu0
      %v195 = vadd.f32 0.0, %v194
      %v196 = vpop.f32.mrb[0].mxu0
      %v197 = vpop.f32.mrb[0].mxu0
      %v198 = vpop.f32.mrb[0].mxu0
      %199 = vdwg.mxu0
      %v200 = vsel %vm153, %v195, -inf
      %201 = vmax.xlane.f32.xlu0 %v200
      %v202 = vpop.xlane.xlu0 %201
      %v203 = vsub.f32 %v195, %v202
      %v204 = vmul.f32 %v203, 1.442695
      %v205 = vpow.pop %v204
      %v206 = vsel %vm153, %v205, 0.0
      %207 = vadd.xlane.f32.xlu0 %v206
      %v208 = vpop.xlane.xlu0 %207
      %v209 = vpack.c.bf16 %v205, %v205
      %210 = vrot.lane.b32.xlu0 %v150, 64
      %v211 = vpop.permute.xlu0 %210
      %v213 = vsel %vm153, %v209, 0
      %vm215 = vcmask 1043456
      %v217 = vsel %vm215, %v211, 0
      %219 = vmatprep.subr.bf16.mxu0 0
      %220 = vmatpush1.bf16.msra.mxu0 %v217
      %221 = vmatprep.subr.bf16.mxu0 0
      %222 = vmatpush1.bf16.msra.mxu0 0
      %223 = vmatprep.subr.bf16.mxu0 0
      %224 = vmatpush1.bf16.msra.mxu0 0
      %225 = vmatprep.subr.bf16.mxu0 0
      %226 = vmatpush1.bf16.msra.mxu0 0
      %227 = vmatprep.subr.bf16.mxu0 0
      %228 = vmatpush1.bf16.msra.mxu0 0
      %229 = vmatprep.subr.bf16.mxu0 0
      %230 = vmatpush1.bf16.msra.mxu0 0
      %231 = vmatprep.subr.bf16.mxu0 0
      %232 = vmatpush1.bf16.msra.mxu0 0
      %233 = vmatprep.subr.bf16.mxu0 0
      %234 = vmatpush1.bf16.msra.mxu0 0
      %235 = vmatprep.subr.bf16.mxu0 0
      %236 = vmatpush1.bf16.msra.mxu0 0
      %237 = vmatprep.subr.bf16.mxu0 0
      %238 = vmatpush1.bf16.msra.mxu0 0
      %239 = vmatprep.subr.bf16.mxu0 0
      %240 = vmatpush1.bf16.msra.mxu0 0
      %241 = vmatprep.subr.bf16.mxu0 0
      %242 = vmatpush1.bf16.msra.mxu0 0
      %243 = vmatprep.subr.bf16.mxu0 0
      %244 = vmatpush1.bf16.msra.mxu0 0
      %245 = vmatprep.subr.bf16.mxu0 0
      %246 = vmatpush1.bf16.msra.mxu0 0
      %247 = vmatprep.subr.bf16.mxu0 0
      %248 = vmatpush1.bf16.msra.mxu0 0
      %249 = vmatprep.subr.bf16.mxu0 0
      %250 = vmatpush1.bf16.msra.mxu0 0
      %251 = vmatprep.mubr.bf16.mxu0 0
      %252 = vmatmul.mubr.bf16.gmra.mrb[0].mxu0 %v213
      %v253 = vpop.f32.mrb[0].mxu0
      %v254 = vadd.f32 0.0, %v253
      %v255 = vpop.f32.mrb[0].mxu0
      %v256 = vpop.f32.mrb[0].mxu0
      %v257 = vpop.f32.mrb[0].mxu0
      %258 = vdwg.mxu0
      %v259 = vrcp.pop %v208
      %v260 = vmul.f32 1.0, %v259
      %v261 = vmul.f32 %v254, %v260
      %v262 = vpack.c.bf16 %v261, %v261
      %263 = vrot.lane.b32.xlu0 %v150, 120
      %v264 = vpop.permute.xlu0 %263
      %265 = vrot.lane.b32.xlu0 %v150, 88
      %v266 = vpop.permute.xlu0 %265
      %v268 = vsel %vm153, %v264, 0
      %v271 = vsel %vm153, %v266, 0
      %273 = vmatprep.subr.bf16.mxu0 0
      %274 = vmatpush1.bf16.xpose.msra.mxu0 %v271
      %275 = vmatprep.subr.bf16.mxu0 0
      %276 = vmatpush1.bf16.xpose.msra.mxu0 0
      %277 = vmatprep.subr.bf16.mxu0 0
      %278 = vmatpush1.bf16.xpose.msra.mxu0 0
      %279 = vmatprep.subr.bf16.mxu0 0
      %280 = vmatpush1.bf16.xpose.msra.mxu0 0
      %281 = vmatprep.subr.bf16.mxu0 0
      %282 = vmatpush1.bf16.xpose.msra.mxu0 0
      %283 = vmatprep.subr.bf16.mxu0 0
      %284 = vmatpush1.bf16.xpose.msra.mxu0 0
      %285 = vmatprep.subr.bf16.mxu0 0
      %286 = vmatpush1.bf16.xpose.msra.mxu0 0
      %287 = vmatprep.subr.bf16.mxu0 0
      %288 = vmatpush1.bf16.xpose.msra.mxu0 0
      %289 = vmatprep.subr.bf16.mxu0 0
      %290 = vmatpush1.bf16.xpose.msra.mxu0 0
      %291 = vmatprep.subr.bf16.mxu0 0
      %292 = vmatpush1.bf16.xpose.msra.mxu0 0
      %293 = vmatprep.subr.bf16.mxu0 0
      %294 = vmatpush1.bf16.xpose.msra.mxu0 0
      %295 = vmatprep.subr.bf16.mxu0 0
      %296 = vmatpush1.bf16.xpose.msra.mxu0 0
      %297 = vmatprep.subr.bf16.mxu0 0
      %298 = vmatpush1.bf16.xpose.msra.mxu0 0
      %299 = vmatprep.subr.bf16.mxu0 0
      %300 = vmatpush1.bf16.xpose.msra.mxu0 0
      %301 = vmatprep.subr.bf16.mxu0 0
      %302 = vmatpush1.bf16.xpose.msra.mxu0 0
      %303 = vmatprep.subr.bf16.mxu0 0
      %304 = vmatpush1.bf16.xpose.msra.mxu0 0
      %305 = vmatprep.mubr.bf16.mxu0 0
      %306 = vmatmul.mubr.bf16.gmra.mrb[0].mxu0 %v268
      %v307 = vpop.f32.mrb[0].mxu0
      %v308 = vadd.f32 0.0, %v307
      %v309 = vpop.f32.mrb[0].mxu0
      %v310 = vpop.f32.mrb[0].mxu0
      %v311 = vpop.f32.mrb[0].mxu0
      %312 = vdwg.mxu0
      %v313 = vsel %vm153, %v308, -inf
      %314 = vmax.xlane.f32.xlu0 %v313
      %v315 = vpop.xlane.xlu0 %314
      %v316 = vsub.f32 %v308, %v315
      %v317 = vmul.f32 %v316, 1.442695
      %v318 = vpow.pop %v317
      %v319 = vsel %vm153, %v318, 0.0
      %320 = vadd.xlane.f32.xlu0 %v319
      %v321 = vpop.xlane.xlu0 %320
      %v322 = vpack.c.bf16 %v318, %v318
      %323 = vrot.lane.b32.xlu0 %v150, 56
      %v324 = vpop.permute.xlu0 %323
      %v326 = vsel %vm153, %v322, 0
      %v329 = vsel %vm215, %v324, 0
      %331 = vmatprep.subr.bf16.mxu0 0
      %332 = vmatpush1.bf16.msra.mxu0 %v329
      %333 = vmatprep.subr.bf16.mxu0 0
      %334 = vmatpush1.bf16.msra.mxu0 0
      %335 = vmatprep.subr.bf16.mxu0 0
      %336 = vmatpush1.bf16.msra.mxu0 0
      %337 = vmatprep.subr.bf16.mxu0 0
      %338 = vmatpush1.bf16.msra.mxu0 0
      %339 = vmatprep.subr.bf16.mxu0 0
      %340 = vmatpush1.bf16.msra.mxu0 0
      %341 = vmatprep.subr.bf16.mxu0 0
      %342 = vmatpush1.bf16.msra.mxu0 0
      %343 = vmatprep.subr.bf16.mxu0 0
      %344 = vmatpush1.bf16.msra.mxu0 0
      %345 = vmatprep.subr.bf16.mxu0 0
      %346 = vmatpush1.bf16.msra.mxu0 0
      %347 = vmatprep.subr.bf16.mxu0 0
      %348 = vmatpush1.bf16.msra.mxu0 0
      %349 = vmatprep.subr.bf16.mxu0 0
      %350 = vmatpush1.bf16.msra.mxu0 0
      %351 = vmatprep.subr.bf16.mxu0 0
      %352 = vmatpush1.bf16.msra.mxu0 0
      %353 = vmatprep.subr.bf16.mxu0 0
      %354 = vmatpush1.bf16.msra.mxu0 0
      %355 = vmatprep.subr.bf16.mxu0 0
      %356 = vmatpush1.bf16.msra.mxu0 0
      %357 = vmatprep.subr.bf16.mxu0 0
      %358 = vmatpush1.bf16.msra.mxu0 0
      %359 = vmatprep.subr.bf16.mxu0 0
      %360 = vmatpush1.bf16.msra.mxu0 0
      %361 = vmatprep.subr.bf16.mxu0 0
      %362 = vmatpush1.bf16.msra.mxu0 0
      %363 = vmatprep.mubr.bf16.mxu0 0
      %364 = vmatmul.mubr.bf16.gmra.mrb[0].mxu0 %v326
      %v365 = vpop.f32.mrb[0].mxu0
      %v366 = vadd.f32 0.0, %v365
      %v367 = vpop.f32.mrb[0].mxu0
      %v368 = vpop.f32.mrb[0].mxu0
      %v369 = vpop.f32.mrb[0].mxu0
      %370 = vdwg.mxu0
      %v371 = vrcp.pop %v321
      %v372 = vmul.f32 1.0, %v371
      %v373 = vmul.f32 %v366, %v372
      %v374 = vpack.c.bf16 %v373, %v373
      %375 = vrot.lane.b32.xlu0 %v150, 112
      %v376 = vpop.permute.xlu0 %375
      %377 = vrot.lane.b32.xlu0 %v150, 80
      %v378 = vpop.permute.xlu0 %377
      %v380 = vsel %vm153, %v376, 0
      %v383 = vsel %vm153, %v378, 0
      %385 = vmatprep.subr.bf16.mxu0 0
      %386 = vmatpush1.bf16.xpose.msra.mxu0 %v383
      %387 = vmatprep.subr.bf16.mxu0 0
      %388 = vmatpush1.bf16.xpose.msra.mxu0 0
      %389 = vmatprep.subr.bf16.mxu0 0
      %390 = vmatpush1.bf16.xpose.msra.mxu0 0
      %391 = vmatprep.subr.bf16.mxu0 0
      %392 = vmatpush1.bf16.xpose.msra.mxu0 0
      %393 = vmatprep.subr.bf16.mxu0 0
      %394 = vmatpush1.bf16.xpose.msra.mxu0 0
      %395 = vmatprep.subr.bf16.mxu0 0
      %396 = vmatpush1.bf16.xpose.msra.mxu0 0
      %397 = vmatprep.subr.bf16.mxu0 0
      %398 = vmatpush1.bf16.xpose.msra.mxu0 0
      %399 = vmatprep.subr.bf16.mxu0 0
      %400 = vmatpush1.bf16.xpose.msra.mxu0 0
      %401 = vmatprep.subr.bf16.mxu0 0
      %402 = vmatpush1.bf16.xpose.msra.mxu0 0
      %403 = vmatprep.subr.bf16.mxu0 0
      %404 = vmatpush1.bf16.xpose.msra.mxu0 0
      %405 = vmatprep.subr.bf16.mxu0 0
      %406 = vmatpush1.bf16.xpose.msra.mxu0 0
      %407 = vmatprep.subr.bf16.mxu0 0
      %408 = vmatpush1.bf16.xpose.msra.mxu0 0
      %409 = vmatprep.subr.bf16.mxu0 0
      %410 = vmatpush1.bf16.xpose.msra.mxu0 0
      %411 = vmatprep.subr.bf16.mxu0 0
      %412 = vmatpush1.bf16.xpose.msra.mxu0 0
      %413 = vmatprep.subr.bf16.mxu0 0
      %414 = vmatpush1.bf16.xpose.msra.mxu0 0
      %415 = vmatprep.subr.bf16.mxu0 0
      %416 = vmatpush1.bf16.xpose.msra.mxu0 0
      %417 = vmatprep.mubr.bf16.mxu0 0
      %418 = vmatmul.mubr.bf16.gmra.mrb[0].mxu0 %v380
      %v419 = vpop.f32.mrb[0].mxu0
      %v420 = vadd.f32 0.0, %v419
      %v421 = vpop.f32.mrb[0].mxu0
      %v422 = vpop.f32.mrb[0].mxu0
      %v423 = vpop.f32.mrb[0].mxu0
      %424 = vdwg.mxu0
      %v425 = vsel %vm153, %v420, -inf
      %426 = vmax.xlane.f32.xlu0 %v425
      %v427 = vpop.xlane.xlu0 %426
      %v428 = vsub.f32 %v420, %v427
      %v429 = vmul.f32 %v428, 1.442695
      %v430 = vpow.pop %v429
      %v431 = vsel %vm153, %v430, 0.0
      %432 = vadd.xlane.f32.xlu0 %v431
      %v433 = vpop.xlane.xlu0 %432
      %v434 = vpack.c.bf16 %v430, %v430
      %435 = vrot.lane.b32.xlu0 %v150, 48
      %v436 = vpop.permute.xlu0 %435
      %v438 = vsel %vm153, %v434, 0
      %v441 = vsel %vm215, %v436, 0
      %443 = vmatprep.subr.bf16.mxu0 0
      %444 = vmatpush1.bf16.msra.mxu0 %v441
      %445 = vmatprep.subr.bf16.mxu0 0
      %446 = vmatpush1.bf16.msra.mxu0 0
      %447 = vmatprep.subr.bf16.mxu0 0
      %448 = vmatpush1.bf16.msra.mxu0 0
      %449 = vmatprep.subr.bf16.mxu0 0
      %450 = vmatpush1.bf16.msra.mxu0 0
      %451 = vmatprep.subr.bf16.mxu0 0
      %452 = vmatpush1.bf16.msra.mxu0 0
      %453 = vmatprep.subr.bf16.mxu0 0
      %454 = vmatpush1.bf16.msra.mxu0 0
      %455 = vmatprep.subr.bf16.mxu0 0
      %456 = vmatpush1.bf16.msra.mxu0 0
      %457 = vmatprep.subr.bf16.mxu0 0
      %458 = vmatpush1.bf16.msra.mxu0 0
      %459 = vmatprep.subr.bf16.mxu0 0
      %460 = vmatpush1.bf16.msra.mxu0 0
      %461 = vmatprep.subr.bf16.mxu0 0
      %462 = vmatpush1.bf16.msra.mxu0 0
      %463 = vmatprep.subr.bf16.mxu0 0
      %464 = vmatpush1.bf16.msra.mxu0 0
      %465 = vmatprep.subr.bf16.mxu0 0
      %466 = vmatpush1.bf16.msra.mxu0 0
      %467 = vmatprep.subr.bf16.mxu0 0
      %468 = vmatpush1.bf16.msra.mxu0 0
      %469 = vmatprep.subr.bf16.mxu0 0
      %470 = vmatpush1.bf16.msra.mxu0 0
      %471 = vmatprep.subr.bf16.mxu0 0
      %472 = vmatpush1.bf16.msra.mxu0 0
      %473 = vmatprep.subr.bf16.mxu0 0
      %474 = vmatpush1.bf16.msra.mxu0 0
      %475 = vmatprep.mubr.bf16.mxu0 0
      %476 = vmatmul.mubr.bf16.gmra.mrb[0].mxu0 %v438
      %v477 = vpop.f32.mrb[0].mxu0
      %v478 = vadd.f32 0.0, %v477
      %v479 = vpop.f32.mrb[0].mxu0
      %v480 = vpop.f32.mrb[0].mxu0
      %v481 = vpop.f32.mrb[0].mxu0
      %482 = vdwg.mxu0
      %v483 = vrcp.pop %v433
      %v484 = vmul.f32 1.0, %v483
      %v485 = vmul.f32 %v478, %v484
      %v486 = vpack.c.bf16 %v485, %v485
      %487 = vrot.lane.b32.xlu0 %v150, 104
      %v488 = vpop.permute.xlu0 %487
      %489 = vrot.lane.b32.xlu0 %v150, 72
      %v490 = vpop.permute.xlu0 %489
      %v492 = vsel %vm153, %v488, 0
      %v495 = vsel %vm153, %v490, 0
      %497 = vmatprep.subr.bf16.mxu0 0
      %498 = vmatpush1.bf16.xpose.msra.mxu0 %v495
      %499 = vmatprep.subr.bf16.mxu0 0
      %500 = vmatpush1.bf16.xpose.msra.mxu0 0
      %501 = vmatprep.subr.bf16.mxu0 0
      %502 = vmatpush1.bf16.xpose.msra.mxu0 0
      %503 = vmatprep.subr.bf16.mxu0 0
      %504 = vmatpush1.bf16.xpose.msra.mxu0 0
      %505 = vmatprep.subr.bf16.mxu0 0
      %506 = vmatpush1.bf16.xpose.msra.mxu0 0
      %507 = vmatprep.subr.bf16.mxu0 0
      %508 = vmatpush1.bf16.xpose.msra.mxu0 0
      %509 = vmatprep.subr.bf16.mxu0 0
      %510 = vmatpush1.bf16.xpose.msra.mxu0 0
      %511 = vmatprep.subr.bf16.mxu0 0
      %512 = vmatpush1.bf16.xpose.msra.mxu0 0
      %513 = vmatprep.subr.bf16.mxu0 0
      %514 = vmatpush1.bf16.xpose.msra.mxu0 0
      %515 = vmatprep.subr.bf16.mxu0 0
      %516 = vmatpush1.bf16.xpose.msra.mxu0 0
      %517 = vmatprep.subr.bf16.mxu0 0
      %518 = vmatpush1.bf16.xpose.msra.mxu0 0
      %519 = vmatprep.subr.bf16.mxu0 0
      %520 = vmatpush1.bf16.xpose.msra.mxu0 0
      %521 = vmatprep.subr.bf16.mxu0 0
      %522 = vmatpush1.bf16.xpose.msra.mxu0 0
      %523 = vmatprep.subr.bf16.mxu0 0
      %524 = vmatpush1.bf16.xpose.msra.mxu0 0
      %525 = vmatprep.subr.bf16.mxu0 0
      %526 = vmatpush1.bf16.xpose.msra.mxu0 0
      %527 = vmatprep.subr.bf16.mxu0 0
      %528 = vmatpush1.bf16.xpose.msra.mxu0 0
      %529 = vmatprep.mubr.bf16.mxu0 0
      %530 = vmatmul.mubr.bf16.gmra.mrb[0].mxu0 %v492
      %v531 = vpop.f32.mrb[0].mxu0
      %v532 = vadd.f32 0.0, %v531
      %v533 = vpop.f32.mrb[0].mxu0
      %v534 = vpop.f32.mrb[0].mxu0
      %v535 = vpop.f32.mrb[0].mxu0
      %536 = vdwg.mxu0
      %v537 = vsel %vm153, %v532, -inf
      %538 = vmax.xlane.f32.xlu0 %v537
      %v539 = vpop.xlane.xlu0 %538
      %v540 = vsub.f32 %v532, %v539
      %v541 = vmul.f32 %v540, 1.442695
      %v542 = vpow.pop %v541
      %v543 = vsel %vm153, %v542, 0.0
      %544 = vadd.xlane.f32.xlu0 %v543
      %v545 = vpop.xlane.xlu0 %544
      %v546 = vpack.c.bf16 %v542, %v542
      %547 = vrot.lane.b32.xlu0 %v150, 40
      %v548 = vpop.permute.xlu0 %547
      %v550 = vsel %vm153, %v546, 0
      %v553 = vsel %vm215, %v548, 0
      %555 = vmatprep.subr.bf16.mxu0 0
      %556 = vmatpush1.bf16.msra.mxu0 %v553
      %557 = vmatprep.subr.bf16.mxu0 0
      %558 = vmatpush1.bf16.msra.mxu0 0
      %559 = vmatprep.subr.bf16.mxu0 0
      %560 = vmatpush1.bf16.msra.mxu0 0
      %561 = vmatprep.subr.bf16.mxu0 0
      %562 = vmatpush1.bf16.msra.mxu0 0
      %563 = vmatprep.subr.bf16.mxu0 0
      %564 = vmatpush1.bf16.msra.mxu0 0
      %565 = vmatprep.subr.bf16.mxu0 0
      %566 = vmatpush1.bf16.msra.mxu0 0
      %567 = vmatprep.subr.bf16.mxu0 0
      %568 = vmatpush1.bf16.msra.mxu0 0
      %569 = vmatprep.subr.bf16.mxu0 0
      %570 = vmatpush1.bf16.msra.mxu0 0
      %571 = vmatprep.subr.bf16.mxu0 0
      %572 = vmatpush1.bf16.msra.mxu0 0
      %573 = vmatprep.subr.bf16.mxu0 0
      %574 = vmatpush1.bf16.msra.mxu0 0
      %575 = vmatprep.subr.bf16.mxu0 0
      %576 = vmatpush1.bf16.msra.mxu0 0
      %577 = vmatprep.subr.bf16.mxu0 0
      %578 = vmatpush1.bf16.msra.mxu0 0
      %579 = vmatprep.subr.bf16.mxu0 0
      %580 = vmatpush1.bf16.msra.mxu0 0
      %581 = vmatprep.subr.bf16.mxu0 0
      %582 = vmatpush1.bf16.msra.mxu0 0
      %583 = vmatprep.subr.bf16.mxu0 0
      %584 = vmatpush1.bf16.msra.mxu0 0
      %585 = vmatprep.subr.bf16.mxu0 0
      %586 = vmatpush1.bf16.msra.mxu0 0
      %587 = vmatprep.mubr.bf16.mxu0 0
      %588 = vmatmul.mubr.bf16.gmra.mrb[0].mxu0 %v550
      %v589 = vpop.f32.mrb[0].mxu0
      %v590 = vadd.f32 0.0, %v589
      %v591 = vpop.f32.mrb[0].mxu0
      %v592 = vpop.f32.mrb[0].mxu0
      %v593 = vpop.f32.mrb[0].mxu0
      %594 = vdwg.mxu0
      %v595 = vrcp.pop %v545
      %v596 = vmul.f32 1.0, %v595
      %v597 = vmul.f32 %v590, %v596
      %v598 = vpack.c.bf16 %v597, %v597
      %600 = vrot.lane.b32.xlu0 %v374, 8
      %v601 = vpop.permute.xlu0 %600
      %603 = vrot.lane.b32.xlu0 %v486, 16
      %v604 = vpop.permute.xlu0 %603
      %606 = vrot.lane.b32.xlu0 %v598, 24
      %v607 = vpop.permute.xlu0 %606
      %v610 = vsel %vm153, %v262, %v601
      %vm611 = vcmask 130048
      %v613 = vsel %vm611, %v610, %v604
      %vm614 = vcmask 195584
      %v616 = vsel %vm614, %v613, %v607
      %vm618 = vcmask 257024
      %619 = vst.msk [vmem:[%s145] sm:$0xf] %vm618, %v616
      %p620 = scmp.lt.s32.totalorder %s16, 1
      %s621 = scalar_select %p620, %s16, 1
      %p622 = scmp.lt.s32.totalorder %s17, 0
      %s623 = scalar_select %p622, %s17, 0
      %s624 = sadd.s32 %s623, %s621
      %s625 = smul.addr %s624, 4
      %s626 = scalar_lea.vmem %s1, %s625
      // Predicated region
      $region25: #{biomedclip_text_forward.13} parent=23 // pred_check
        %p627 = pneg %p72
      $region26: #{biomedclip_text_forward.13} parent=23 // pred_check_branch
        %629 = sbr.rel (%p627) target = $region28
      $region27: #{biomedclip_text_forward.13} parent=23 // pred_region
        _
      $region28: #{biomedclip_text_forward.13} parent=23 // pred_fallthru
        _
    $region24: #{biomedclip_text_forward.13} parent=5 // pred_fallthru
      _
    %p630 = scmp.le.s32.totalorder 2, %s7
    // Predicated region
    $region29: #{biomedclip_text_forward.13} parent=5 // pred_check
      %p631 = pneg %p630
    $region30: #{biomedclip_text_forward.13} parent=5 // pred_check_branch
      %633 = sbr.rel (%p631) target = $region32
    $region31: #{biomedclip_text_forward.13} parent=5 // pred_region
      %s634 = ssub.s32 %s7, 2
      // Predicated region
      $region33: #{biomedclip_text_forward.13} parent=31 // pred_check
        %p635 = pneg %p78
      $region34: #{biomedclip_text_forward.13} parent=31 // pred_check_branch
        %637 = sbr.rel (%p635) target = $region36
      $region35: #{biomedclip_text_forward.13} parent=31 // pred_region
        %p638 = scmp.lt.s32.totalorder %s18, 1
        %s639 = scalar_select %p638, %s18, 1
        %p640 = scmp.lt.s32.totalorder %s19, 0
        %s641 = scalar_select %p640, %s19, 0
        %s642 = sadd.s32 %s641, %s639
        %s643 = smul.addr %s642, 4
        %s644 = scalar_lea.vmem %s1, %s643
      $region36: #{biomedclip_text_forward.13} parent=31 // pred_fallthru
        _
    $region32: #{biomedclip_text_forward.13} parent=5 // pred_fallthru
      _
  $region6: #{biomedclip_text_forward.13} parent=0 // loop_footer
    %s11 = sadd.s32 1, %s7
  $region7: #{biomedclip_text_forward.13} parent=0 // loop_footer_branch
    %6 = sbr.rel target = $region3
  $region8: #{biomedclip_text_forward.13} parent=0 // loop_exit
    _

// kernel: biomedclip_text_forward.15
$region0: #{biomedclip_text_forward.15}
  #allocation0 [shape = 'u32[]', space=smem, size = 0x4, offset = 0x4, fixed_abs, tag = 'smem constant byte address 0x4 - core index']
  #allocation1 [shape = 'u32[144,128]{1,0:T(1,128)}', space=vmem, size = 0x12000, scoped, tag = 'internal scratch']
  %s0 = inlined_call_operand.vmem [shape: bf16[16,32], index: 0, kind: input, shape index: {}]
  %s1 = inlined_call_operand.vmem [shape: bf16[32,64], index: 1, kind: input, shape index: {}]
  %s2 = inlined_call_operand.vmem [shape: f32[1,64], index: 2, kind: input, shape index: {}]
  %s3 = inlined_call_operand.vmem [shape: bf16[16,64], index: 3, kind: output, shape index: {}]
  %s4 = sld [smem:[#allocation0]]
  $region22: #{biomedclip_text_forward.15} parent=0
    _
  %s6 = ssub.s32 1, %s4
  %s7 = scalar_select 0, %s6, %s4
  // Predicated region
  $region2: #{biomedclip_text_forward.15} parent=0 // pred_check
    _
  $region3: #{biomedclip_text_forward.15} parent=0 // pred_check_branch
    %9 = sbr.rel (0) target = $region5
  $region4: #{biomedclip_text_forward.15} parent=0 // pred_region
    _
  $region5: #{biomedclip_text_forward.15} parent=0 // pred_fallthru
    _
  // Predicated region
  $region6: #{biomedclip_text_forward.15} parent=0 // pred_check
    _
  $region7: #{biomedclip_text_forward.15} parent=0 // pred_check_branch
    %11 = sbr.rel (0) target = $region9
  $region8: #{biomedclip_text_forward.15} parent=0 // pred_region
    _
  $region9: #{biomedclip_text_forward.15} parent=0 // pred_fallthru
    _
  // Predicated region
  $region10: #{biomedclip_text_forward.15} parent=0 // pred_check
    _
  $region11: #{biomedclip_text_forward.15} parent=0 // pred_check_branch
    %13 = sbr.rel (0) target = $region13
  $region12: #{biomedclip_text_forward.15} parent=0 // pred_region
    _
  $region13: #{biomedclip_text_forward.15} parent=0 // pred_fallthru
    _
  %v15 = vld [vmem:[%s0] sm:$0xf]
  %v16 = vld [vmem:[%s0 + $0x4] sm:$0xf]
  %v17 = vld [vmem:[%s1] sm:$0xf]
  %v18 = vld [vmem:[%s1 + $0x4] sm:$0xf]
  %v19 = vld [vmem:[%s1 + $0x8] sm:$0xf]
  %v20 = vld [vmem:[%s1 + $0xc] sm:$0xf]
  %v21 = vld [vmem:[%s2] sm:$0x1]
  %v23 = vlaneseq
  %v24 = vshrl.u32 %v23, 7
  %v25 = vsub.s32 0, %v24
  %v26 = vrot.slane %v21, %v25
  %v30 = vunpack.c.l.b16 %v15
  %v31 = vunpack.c.l.b16 %v16
  %v32 = vpack.c.b16 %v31, %v30
  %v37 = vunpack.c.l.b16 %v17
  %v38 = vunpack.c.l.b16 %v18
  %v39 = vunpack.c.l.b16 %v19
  %v40 = vunpack.c.l.b16 %v20
  %v41 = vpack.c.b16 %v38, %v37
  %v42 = vpack.c.b16 %v40, %v39
  %vm45 = vcmask 261120
  %v47 = vsel %vm45, %v32, 0
  %49 = vmatprep.subr.bf16.mxu0 0
  %50 = vmatpush1.bf16.msra.mxu0 %v41
  %51 = vmatprep.subr.bf16.mxu0 0
  %52 = vmatpush1.bf16.msra.mxu0 %v42
  %53 = vmatprep.subr.bf16.mxu0 0
  %54 = vmatpush1.bf16.msra.mxu0 0
  %55 = vmatprep.subr.bf16.mxu0 0
  %56 = vmatpush1.bf16.msra.mxu0 0
  %57 = vmatprep.subr.bf16.mxu0 0
  %58 = vmatpush1.bf16.msra.mxu0 0
  %59 = vmatprep.subr.bf16.mxu0 0
  %60 = vmatpush1.bf16.msra.mxu0 0
  %61 = vmatprep.subr.bf16.mxu0 0
  %62 = vmatpush1.bf16.msra.mxu0 0
  %63 = vmatprep.subr.bf16.mxu0 0
  %64 = vmatpush1.bf16.msra.mxu0 0
  %65 = vmatprep.subr.bf16.mxu0 0
  %66 = vmatpush1.bf16.msra.mxu0 0
  %67 = vmatprep.subr.bf16.mxu0 0
  %68 = vmatpush1.bf16.msra.mxu0 0
  %69 = vmatprep.subr.bf16.mxu0 0
  %70 = vmatpush1.bf16.msra.mxu0 0
  %71 = vmatprep.subr.bf16.mxu0 0
  %72 = vmatpush1.bf16.msra.mxu0 0
  %73 = vmatprep.subr.bf16.mxu0 0
  %74 = vmatpush1.bf16.msra.mxu0 0
  %75 = vmatprep.subr.bf16.mxu0 0
  %76 = vmatpush1.bf16.msra.mxu0 0
  %77 = vmatprep.subr.bf16.mxu0 0
  %78 = vmatpush1.bf16.msra.mxu0 0
  %79 = vmatprep.subr.bf16.mxu0 0
  %80 = vmatpush1.bf16.msra.mxu0 0
  %81 = vmatprep.mubr.bf16.mxu0 0
  %82 = vmatmul.mubr.bf16.gmra.mrb[0].mxu0 %v47
  %v83 = vpop.f32.mrb[0].mxu0
  %v84 = vadd.f32 %v26, %v83
  %v85 = vpop.f32.mrb[0].mxu0
  %v86 = vpop.f32.mrb[0].mxu0
  %v87 = vadd.f32 %v26, %v86
  %v88 = vpop.f32.mrb[0].mxu0
  %89 = vdwg.mxu0
  %v90 = vmul.f32 %v84, %v84
  %v91 = vmul.f32 %v87, %v87
  %v92 = vmul.f32 %v84, %v90
  %v93 = vmul.f32 %v87, %v91
  %v94 = vmul.f32 %v92, 0.044715
  %v95 = vmul.f32 %v93, 0.044715
  %v96 = vadd.f32 %v84, %v94
  %v97 = vadd.f32 %v87, %v95
  %v98 = vmul.f32 %v96, 0.7978846
  %v99 = vmul.f32 %v97, 0.7978846
  %v100 = vtanh.pop %v98
  %v101 = vtanh.pop %v99
  %v102 = vadd.f32 %v100, 1.0
  %v103 = vadd.f32 %v101, 1.0
  %v104 = vmul.f32 %v102, 0.5
  %v105 = vmul.f32 %v103, 0.5
  %v106 = vmul.f32 %v84, %v104
  %v107 = vmul.f32 %v87, %v105
  %v108 = vpack.c.bf16 %v107, %v106
  %v110 = vunpack.c.l.b16 %v108
  %v111 = vunpack.c.h.b16 %v108
  %v112 = vpack.c.b16 %v110, %v110
  %v113 = vpack.c.b16 %v111, %v111
  %vm116 = vcmask 519168
  %117 = vst.msk [vmem:[%s3] sm:$0xf] %vm116, %v112
  %118 = vst.msk [vmem:[%s3 + $0x4] sm:$0xf] %vm116, %v113
  // Predicated region
  $region14: #{biomedclip_text_forward.15} parent=0 // pred_check
    _
  $region15: #{biomedclip_text_forward.15} parent=0 // pred_check_branch
    %120 = sbr.rel (0) target = $region17
  $region16: #{biomedclip_text_forward.15} parent=0 // pred_region
    _
  $region17: #{biomedclip_text_forward.15} parent=0 // pred_fallthru
    _
  // Predicated region
  $region18: #{biomedclip_text_forward.15} parent=0 // pred_check
    _
  $region19: #{biomedclip_text_forward.15} parent=0 // pred_check_branch
    %122 = sbr.rel (0) target = $region21
  $region20: #{biomedclip_text_forward.15} parent=0 // pred_region
    _
  $region21: #{biomedclip_text_forward.15} parent=0 // pred_fallthru
    _

// kernel: biomedclip_text_forward.16
$region0: #{biomedclip_text_forward.16}
  #allocation0 [shape = 'u32[]', space=smem, size = 0x4, offset = 0x4, fixed_abs, tag = 'smem constant byte address 0x4 - core index']
  #allocation1 [shape = 'u32[144,128]{1,0:T(1,128)}', space=vmem, size = 0x12000, scoped, tag = 'internal scratch']
  %s0 = inlined_call_operand.vmem [shape: bf16[16,64], index: 0, kind: input, shape index: {}]
  %s1 = inlined_call_operand.vmem [shape: bf16[64,32], index: 1, kind: input, shape index: {}]
  %s2 = inlined_call_operand.vmem [shape: f32[1,32], index: 2, kind: input, shape index: {}]
  %s3 = inlined_call_operand.vmem [shape: bf16[16,32], index: 3, kind: input, shape index: {}]
  %s4 = inlined_call_operand.vmem [shape: f32[1,32], index: 4, kind: input, shape index: {}]
  %s5 = inlined_call_operand.vmem [shape: f32[1,32], index: 5, kind: input, shape index: {}]
  %s6 = inlined_call_operand.vmem [shape: bf16[16,32], index: 6, kind: output, shape index: {}]
  %s7 = sld [smem:[#allocation0]]
  $region57: #{biomedclip_text_forward.16} parent=0
    _
  %s9 = ssub.s32 1, %s7
  %s10 = scalar_select 0, %s9, %s7
  loop: start=0, step=1, limit=4
  $region2: #{biomedclip_text_forward.16} parent=0 // loop_pre_header
    _
  $region3: #{biomedclip_text_forward.16} parent=0 // loop_header
    %s12 = sphi 0, %s16
    %p13 = scmp.ge.s32.totalorder %s12, 4
    %s22 = sphi 0, %s24
    %s25 = sphi 0, %s22
    %s26 = sphi 0, %s25
    %s42 = sphi 0, %s26
    %s46 = sphi 0, %s46
    %s48 = sphi 0, %s46
    %s49 = sphi 0, %s48
    %s63 = sphi 0, %s49
    %s67 = sphi 0, %s67
    %s69 = sphi 0, %s67
    %s70 = sphi 0, %s69
    %s84 = sphi 0, %s70
    %s90 = sphi 0, %s92
    %s93 = sphi 0, %s90
    %s94 = sphi 0, %s93
    %s110 = sphi 0, %s94
    %s114 = sphi 0, %s114
    %s116 = sphi 0, %s114
    %s117 = sphi 0, %s116
    %s131 = sphi 0, %s117
    %s135 = sphi 0, %s135
    %s137 = sphi 0, %s135
    %s138 = sphi 0, %s137
    %s152 = sphi 0, %s138
    %s158 = sphi 0, %s160
    %s161 = sphi 0, %s158
    %s162 = sphi 0, %s161
    %s178 = sphi 0, %s162
  $region4: #{biomedclip_text_forward.16} parent=0 // loop_header_branch
    %15 = sbr.rel (%p13) target = $region8
  $region5: #{biomedclip_text_forward.16} parent=0 // loop_body
    %s17 = ssub.s32 %s12, 1
    %s18 = ssub.s32 %s12, 2
    %s19 = sadd.s32 %s12, 1
    %s20 = ssub.s32 %s12, %s19
    %p21 = scmp.eq.s32.totalorder %s20, 0
    %s23 = sadd.s32 %s22, 1
    %s24 = scalar_select %p21, %s22, %s23
    %p27 = pneg %p21
    %p28 = scmp.eq.s32.totalorder %s12, 1
    %p29 = por %p27, %p28
    %p30 = scmp.ne.s32.totalorder %s22, %s25
    %p31 = scmp.eq.s32.totalorder %s12, 0
    %p32 = por %p30, %p31
    %p33 = scmp.ne.s32.totalorder %s22, %s25
    %p34 = scmp.eq.s32.totalorder %s17, 1
    %p35 = por %p33, %p34
    %p36 = scmp.ne.s32.totalorder %s25, %s26
    %p37 = scmp.eq.s32.totalorder %s17, 0
    %p38 = por %p36, %p37
    %p39 = scmp.ne.s32.totalorder %s25, %s26
    %p40 = scmp.eq.s32.totalorder %s18, 1
    %p41 = por %p39, %p40
    %p43 = scmp.ne.s32.totalorder %s26, %s42
    %p44 = scmp.eq.s32.totalorder %s18, 0
    %p45 = por %p43, %p44
    %s47 = sadd.s32 %s46, 1
    %p50 = scmp.eq.s32.totalorder %s12, 1
    %p51 = scmp.ne.s32.totalorder %s46, %s48
    %p52 = scmp.eq.s32.totalorder %s12, 0
    %p53 = por %p51, %p52
    %p54 = scmp.ne.s32.totalorder %s46, %s48
    %p55 = scmp.eq.s32.totalorder %s17, 1
    %p56 = por %p54, %p55
    %p57 = scmp.ne.s32.totalorder %s48, %s49
    %p58 = scmp.eq.s32.totalorder %s17, 0
    %p59 = por %p57, %p58
    %p60 = scmp.ne.s32.totalorder %s48, %s49
    %p61 = scmp.eq.s32.totalorder %s18, 1
    %p62 = por %p60, %p61
    %p64 = scmp.ne.s32.totalorder %s49, %s63
    %p65 = scmp.eq.s32.totalorder %s18, 0
    %p66 = por %p64, %p65
    %s68 = sadd.s32 %s67, 1
    %p71 = scmp.eq.s32.totalorder %s12, 1
    %p72 = scmp.ne.s32.totalorder %s67, %s69
    %p73 = scmp.eq.s32.totalorder %s12, 0
    %p74 = por %p72, %p73
    %p75 = scmp.ne.s32.totalorder %s67, %s69
    %p76 = scmp.eq.s32.totalorder %s17, 1
    %p77 = por %p75, %p76
    %p78 = scmp.ne.s32.totalorder %s69, %s70
    %p79 = scmp.eq.s32.totalorder %s17, 0
    %p80 = por %p78, %p79
    %p81 = scmp.ne.s32.totalorder %s69, %s70
    %p82 = scmp.eq.s32.totalorder %s18, 1
    %p83 = por %p81, %p82
    %p85 = scmp.ne.s32.totalorder %s70, %s84
    %p86 = scmp.eq.s32.totalorder %s18, 0
    %p87 = por %p85, %p86
    %s88 = ssub.s32 %s12, %s19
    %p89 = scmp.eq.s32.totalorder %s88, 0
    %s91 = sadd.s32 %s90, 1
    %s92 = scalar_select %p89, %s90, %s91
    %p95 = pneg %p89
    %p96 = scmp.eq.s32.totalorder %s12, 1
    %p97 = por %p95, %p96
    %p98 = scmp.ne.s32.totalorder %s90, %s93
    %p99 = scmp.eq.s32.totalorder %s12, 0
    %p100 = por %p98, %p99
    %p101 = scmp.ne.s32.totalorder %s90, %s93
    %p102 = scmp.eq.s32.totalorder %s17, 1
    %p103 = por %p101, %p102
    %p104 = scmp.ne.s32.totalorder %s93, %s94
    %p105 = scmp.eq.s32.totalorder %s17, 0
    %p106 = por %p104, %p105
    %p107 = scmp.ne.s32.totalorder %s93, %s94
    %p108 = scmp.eq.s32.totalorder %s18, 1
    %p109 = por %p107, %p108
    %p111 = scmp.ne.s32.totalorder %s94, %s110
    %p112 = scmp.eq.s32.totalorder %s18, 0
    %p113 = por %p111, %p112
    %s115 = sadd.s32 %s114, 1
    %p118 = scmp.eq.s32.totalorder %s12, 1
    %p119 = scmp.ne.s32.totalorder %s114, %s116
    %p120 = scmp.eq.s32.totalorder %s12, 0
    %p121 = por %p119, %p120
    %p122 = scmp.ne.s32.totalorder %s114, %s116
    %p123 = scmp.eq.s32.totalorder %s17, 1
    %p124 = por %p122, %p123
    %p125 = scmp.ne.s32.totalorder %s116, %s117
    %p126 = scmp.eq.s32.totalorder %s17, 0
    %p127 = por %p125, %p126
    %p128 = scmp.ne.s32.totalorder %s116, %s117
    %p129 = scmp.eq.s32.totalorder %s18, 1
    %p130 = por %p128, %p129
    %p132 = scmp.ne.s32.totalorder %s117, %s131
    %p133 = scmp.eq.s32.totalorder %s18, 0
    %p134 = por %p132, %p133
    %s136 = sadd.s32 %s135, 1
    %p139 = scmp.eq.s32.totalorder %s12, 1
    %p140 = scmp.ne.s32.totalorder %s135, %s137
    %p141 = scmp.eq.s32.totalorder %s12, 0
    %p142 = por %p140, %p141
    %p143 = scmp.ne.s32.totalorder %s135, %s137
    %p144 = scmp.eq.s32.totalorder %s17, 1
    %p145 = por %p143, %p144
    %p146 = scmp.ne.s32.totalorder %s137, %s138
    %p147 = scmp.eq.s32.totalorder %s17, 0
    %p148 = por %p146, %p147
    %p149 = scmp.ne.s32.totalorder %s137, %s138
    %p150 = scmp.eq.s32.totalorder %s18, 1
    %p151 = por %p149, %p150
    %p153 = scmp.ne.s32.totalorder %s138, %s152
    %p154 = scmp.eq.s32.totalorder %s18, 0
    %p155 = por %p153, %p154
    %s156 = ssub.s32 %s12, %s19
    %p157 = scmp.eq.s32.totalorder %s156, 0
    %s159 = sadd.s32 %s158, 1
    %s160 = scalar_select %p157, %s158, %s159
    %p163 = pneg %p157
    %p164 = scmp.eq.s32.totalorder %s12, 1
    %p165 = por %p163, %p164
    %p166 = scmp.ne.s32.totalorder %s158, %s161
    %p167 = scmp.eq.s32.totalorder %s12, 0
    %p168 = por %p166, %p167
    %p169 = scmp.ne.s32.totalorder %s158, %s161
    %p170 = scmp.eq.s32.totalorder %s17, 1
    %p171 = por %p169, %p170
    %p172 = scmp.ne.s32.totalorder %s161, %s162
    %p173 = scmp.eq.s32.totalorder %s17, 0
    %p174 = por %p172, %p173
    %p175 = scmp.ne.s32.totalorder %s161, %s162
    %p176 = scmp.eq.s32.totalorder %s18, 1
    %p177 = por %p175, %p176
    %p179 = scmp.ne.s32.totalorder %s162, %s178
    %p180 = scmp.eq.s32.totalorder %s18, 0
    %p181 = por %p179, %p180
    %p182 = scmp.le.s32.totalorder 1, %s12
    %p183 = scmp.lt.s32.totalorder %s12, 3
    %p184 = pnand %p182, %p183
    %p185 = pneg %p184
    // Predicated region
    $region9: #{biomedclip_text_forward.16} parent=5 // pred_check
      _
    $region10: #{biomedclip_text_forward.16} parent=5 // pred_check_branch
      %187 = sbr.rel (%p184) target = $region12
    $region11: #{biomedclip_text_forward.16} parent=5 // pred_region
      %s188 = ssub.s32 %s12, 1
      // Predicated region
      $region13: #{biomedclip_text_forward.16} parent=11 // pred_check
        %p189 = pneg %p59
      $region14: #{biomedclip_text_forward.16} parent=11 // pred_check_branch
        %191 = sbr.rel (%p189) target = $region16
      $region15: #{biomedclip_text_forward.16} parent=11 // pred_region
        _
      $region16: #{biomedclip_text_forward.16} parent=11 // pred_fallthru
        _
      // Predicated region
      $region17: #{biomedclip_text_forward.16} parent=11 // pred_check
        %p192 = pneg %p80
      $region18: #{biomedclip_text_forward.16} parent=11 // pred_check_branch
        %194 = sbr.rel (%p192) target = $region20
      $region19: #{biomedclip_text_forward.16} parent=11 // pred_region
        _
      $region20: #{biomedclip_text_forward.16} parent=11 // pred_fallthru
        _
      // Predicated region
      $region21: #{biomedclip_text_forward.16} parent=11 // pred_check
        %p195 = pneg %p127
      $region22: #{biomedclip_text_forward.16} parent=11 // pred_check_branch
        %197 = sbr.rel (%p195) target = $region24
      $region23: #{biomedclip_text_forward.16} parent=11 // pred_region
        _
      $region24: #{biomedclip_text_forward.16} parent=11 // pred_fallthru
        _
      // Predicated region
      $region25: #{biomedclip_text_forward.16} parent=11 // pred_check
        %p198 = pneg %p148
      $region26: #{biomedclip_text_forward.16} parent=11 // pred_check_branch
        %200 = sbr.rel (%p198) target = $region28
      $region27: #{biomedclip_text_forward.16} parent=11 // pred_region
        _
      $region28: #{biomedclip_text_forward.16} parent=11 // pred_fallthru
        _
    $region12: #{biomedclip_text_forward.16} parent=5 // pred_fallthru
      _
    %p201 = scmp.lt.s32.totalorder %s12, 2
    // Predicated region
    $region29: #{biomedclip_text_forward.16} parent=5 // pred_check
      %p202 = pneg %p201
    $region30: #{biomedclip_text_forward.16} parent=5 // pred_check_branch
      %204 = sbr.rel (%p202) target = $region32
    $region31: #{biomedclip_text_forward.16} parent=5 // pred_region
      // Predicated region
      $region33: #{biomedclip_text_forward.16} parent=31 // pred_check
        %p205 = pneg %p32
      $region34: #{biomedclip_text_forward.16} parent=31 // pred_check_branch
        %207 = sbr.rel (%p205) target = $region36
      $region35: #{biomedclip_text_forward.16} parent=31 // pred_region
        %p208 = scmp.lt.s32.totalorder %s12, 1
        %s209 = scalar_select %p208, %s12, 1
        %s210 = smul.addr %s209, 4
        %s211 = scalar_lea.vmem %s0, %s210
      $region36: #{biomedclip_text_forward.16} parent=31 // pred_fallthru
        _
      // Predicated region
      $region37: #{biomedclip_text_forward.16} parent=31 // pred_check
        %p212 = pneg %p100
      $region38: #{biomedclip_text_forward.16} parent=31 // pred_check_branch
        %214 = sbr.rel (%p212) target = $region40
      $region39: #{biomedclip_text_forward.16} parent=31 // pred_region
        %p215 = scmp.lt.s32.totalorder %s12, 1
        %s216 = scalar_select %p215, %s12, 1
        %s217 = smul.addr %s216, 4
        %s218 = scalar_lea.vmem %s3, %s217
      $region40: #{biomedclip_text_forward.16} parent=31 // pred_fallthru
        _
    $region32: #{biomedclip_text_forward.16} parent=5 // pred_fallthru
      _
    %p219 = scmp.le.s32.totalorder 1, %s12
    %p220 = scmp.lt.s32.totalorder %s12, 3
    %p221 = pnand %p219, %p220
    %p222 = pneg %p221
    // Predicated region
    $region41: #{biomedclip_text_forward.16} parent=5 // pred_check
      _
    $region42: #{biomedclip_text_forward.16} parent=5 // pred_check_branch
      %224 = sbr.rel (%p221) target = $region44
    $region43: #{biomedclip_text_forward.16} parent=5 // pred_region
      %s225 = ssub.s32 %s12, 1
      %p226 = scmp.lt.s32.totalorder %s17, 1
      %s227 = scalar_select %p226, %s17, 1
      %s228 = smul.addr %s227, 4
      %s229 = scalar_lea.vmem %s0, %s228
      %p230 = pneg %p38
      %p231 = pneg %p35
      %p232 = pneg %p59
      %p233 = pneg %p56
      %p234 = pneg %p80
      %p235 = pneg %p77
      %p236 = scmp.lt.s32.totalorder %s17, 1
      %s237 = scalar_select %p236, %s17, 1
      %s238 = smul.addr %s237, 4
      %s239 = scalar_lea.vmem %s3, %s238
      %p240 = pneg %p106
      %p241 = pneg %p103
      %p242 = pneg %p127
      %p243 = pneg %p124
      %p244 = pneg %p148
      %p245 = pneg %p145
      %p246 = pneg %p174
      %p247 = pneg %p171
      %p248 = scmp.lt.s32.totalorder %s17, 1
      %s249 = scalar_select %p248, %s17, 1
      %s250 = smul.addr %s249, 4
      %s251 = scalar_lea.vmem %s6, %s250
      %p252 = scmp.lt.s32.totalorder %s17, 1
      %s253 = scalar_select %p252, %s17, 1
      %s254 = smul.addr %s253, 4
      %s255 = scalar_lea.vmem %s0, %s254
      %p256 = scmp.lt.s32.totalorder %s17, 1
      %s257 = scalar_select %p256, %s17, 1
      %s258 = smul.addr %s257, 4
      %s259 = scalar_lea.vmem %s3, %s258
      %p260 = scmp.lt.s32.totalorder %s17, 1
      %s261 = scalar_select %p260, %s17, 1
      %s262 = smul.addr %s261, 4
      %s263 = scalar_lea.vmem %s6, %s262
      %v265 = vld [vmem:[%s255] sm:$0xf]
      %v266 = vld [vmem:[%s1] sm:$0xf]
      %v267 = vld [vmem:[%s1 + $0x4] sm:$0xf]
      %v268 = vld [vmem:[%s1 + $0x8] sm:$0xf]
      %v269 = vld [vmem:[%s1 + $0xc] sm:$0xf]
      %v270 = vld [vmem:[%s1 + $0x10] sm:$0xf]
      %v271 = vld [vmem:[%s1 + $0x14] sm:$0xf]
      %v272 = vld [vmem:[%s1 + $0x18] sm:$0xf]
      %v273 = vld [vmem:[%s1 + $0x1c] sm:$0xf]
      %v274 = vld [vmem:[%s2] sm:$0x1]
      %v276 = vlaneseq
      %v277 = vshrl.u32 %v276, 7
      %v278 = vsub.s32 0, %v277
      %v279 = vrot.slane %v274, %v278
      %v289 = vunpack.c.l.b16 %v266
      %v290 = vunpack.c.l.b16 %v267
      %v291 = vunpack.c.l.b16 %v268
      %v292 = vunpack.c.l.b16 %v269
      %v293 = vunpack.c.l.b16 %v270
      %v294 = vunpack.c.l.b16 %v271
      %v295 = vunpack.c.l.b16 %v272
      %v296 = vunpack.c.l.b16 %v273
      %v297 = vpack.c.b16 %v290, %v289
      %v298 = vpack.c.b16 %v292, %v291
      %v299 = vpack.c.b16 %v294, %v293
      %v300 = vpack.c.b16 %v296, %v295
      %vm305 = vcmask 523264
      %v307 = vsel %vm305, %v265, 0
      %309 = vmatprep.subr.bf16.mxu0 0
      %310 = vmatpush1.bf16.msra.mxu0 %v297
      %311 = vmatprep.subr.bf16.mxu0 0
      %312 = vmatpush1.bf16.msra.mxu0 %v298
      %313 = vmatprep.subr.bf16.mxu0 0
      %314 = vmatpush1.bf16.msra.mxu0 %v299
      %315 = vmatprep.subr.bf16.mxu0 0
      %316 = vmatpush1.bf16.msra.mxu0 %v300
      %317 = vmatprep.subr.bf16.mxu0 0
      %318 = vmatpush1.bf16.msra.mxu0 0
      %319 = vmatprep.subr.bf16.mxu0 0
      %320 = vmatpush1.bf16.msra.mxu0 0
      %321 = vmatprep.subr.bf16.mxu0 0
      %322 = vmatpush1.bf16.msra.mxu0 0
      %323 = vmatprep.subr.bf16.mxu0 0
      %324 = vmatpush1.bf16.msra.mxu0 0
      %325 = vmatprep.subr.bf16.mxu0 0
      %326 = vmatpush1.bf16.msra.mxu0 0
      %327 = vmatprep.subr.bf16.mxu0 0
      %328 = vmatpush1.bf16.msra.mxu0 0
      %329 = vmatprep.subr.bf16.mxu0 0
      %330 = vmatpush1.bf16.msra.mxu0 0
      %331 = vmatprep.subr.bf16.mxu0 0
      %332 = vmatpush1.bf16.msra.mxu0 0
      %333 = vmatprep.subr.bf16.mxu0 0
      %334 = vmatpush1.bf16.msra.mxu0 0
      %335 = vmatprep.subr.bf16.mxu0 0
      %336 = vmatpush1.bf16.msra.mxu0 0
      %337 = vmatprep.subr.bf16.mxu0 0
      %338 = vmatpush1.bf16.msra.mxu0 0
      %339 = vmatprep.subr.bf16.mxu0 0
      %340 = vmatpush1.bf16.msra.mxu0 0
      %341 = vmatprep.mubr.bf16.mxu0 0
      %342 = vmatmul.mubr.bf16.gmra.mrb[0].mxu0 %v307
      %v343 = vpop.f32.mrb[0].mxu0
      %v344 = vadd.f32 %v279, %v343
      %v345 = vpop.f32.mrb[0].mxu0
      %v346 = vpop.f32.mrb[0].mxu0
      %v347 = vpop.f32.mrb[0].mxu0
      %348 = vdwg.mxu0
      %v349 = vld [vmem:[%s259] sm:$0xf]
      %v350 = vunpack.c.l.bf16 %v349
      %v351 = vadd.f32 %v344, %v350
      %vm352 = vcmask 261120
      %v353 = vsel %vm352, %v351, 0.0
      %354 = vadd.xlane.f32.xlu0 %v353
      %v355 = vpop.xlane.xlu0 %354
      %v356 = vrcp.pop 32.0
      %v357 = vmul.f32 %v355, %v356
      %v358 = vsub.f32 %v351, %v357
      %v359 = vmul.f32 %v358, %v358
      %v360 = vsel %vm352, %v359, 0.0
      %361 = vadd.xlane.f32.xlu0 %v360
      %v362 = vpop.xlane.xlu0 %361
      %v363 = vmul.f32 %v362, %v356
      %v364 = vadd.f32 %v363, 1e-12
      %v365 = vrsqrt.pop %v364
      %v366 = vmul.f32 %v358, %v365
      %v367 = vld [vmem:[%s4] sm:$0x1]
      %v369 = vlaneseq
      %v370 = vshrl.u32 %v369, 7
      %v371 = vsub.s32 0, %v370
      %v372 = vrot.slane %v367, %v371
      %v374 = vmul.f32 %v366, %v372
      %v375 = vld [vmem:[%s5] sm:$0x1]
      %v377 = vlaneseq
      %v378 = vshrl.u32 %v377, 7
      %v379 = vsub.s32 0, %v378
      %v380 = vrot.slane %v375, %v379
      %v382 = vadd.f32 %v374, %v380
      %v383 = vpack.c.bf16 %v382, %v382
      %vm384 = vcmask 257024
      %385 = vst.msk [vmem:[%s263] sm:$0xf] %vm384, %v383
      %p386 = scmp.lt.s32.totalorder %s17, 1
      %s387 = scalar_select %p386, %s17, 1
      %s388 = smul.addr %s387, 4
      %s389 = scalar_lea.vmem %s6, %s388
      // Predicated region
      $region45: #{biomedclip_text_forward.16} parent=43 // pred_check
        %p390 = pneg %p171
      $region46: #{biomedclip_text_forward.16} parent=43 // pred_check_branch
        %392 = sbr.rel (%p390) target = $region48
      $region47: #{biomedclip_text_forward.16} parent=43 // pred_region
        _
      $region48: #{biomedclip_text_forward.16} parent=43 // pred_fallthru
        _
    $region44: #{biomedclip_text_forward.16} parent=5 // pred_fallthru
      _
    %p393 = scmp.le.s32.totalorder 2, %s12
    // Predicated region
    $region49: #{biomedclip_text_forward.16} parent=5 // pred_check
      %p394 = pneg %p393
    $region50: #{biomedclip_text_forward.16} parent=5 // pred_check_branch
      %396 = sbr.rel (%p394) target = $region52
    $region51: #{biomedclip_text_forward.16} parent=5 // pred_region
      %s397 = ssub.s32 %s12, 2
      // Predicated region
      $region53: #{biomedclip_text_forward.16} parent=51 // pred_check
        %p398 = pneg %p177
      $region54: #{biomedclip_text_forward.16} parent=51 // pred_check_branch
        %400 = sbr.rel (%p398) target = $region56
      $region55: #{biomedclip_text_forward.16} parent=51 // pred_region
        %p401 = scmp.lt.s32.totalorder %s18, 1
        %s402 = scalar_select %p401, %s18, 1
        %s403 = smul.addr %s402, 4
        %s404 = scalar_lea.vmem %s6, %s403
      $region56: #{biomedclip_text_forward.16} parent=51 // pred_fallthru
        _
    $region52: #{biomedclip_text_forward.16} parent=5 // pred_fallthru
      _
  $region6: #{biomedclip_text_forward.16} parent=0 // loop_footer
    %s16 = sadd.s32 1, %s12
  $region7: #{biomedclip_text_forward.16} parent=0 // loop_footer_branch
    %11 = sbr.rel target = $region3
  $region8: #{biomedclip_text_forward.16} parent=0 // loop_exit
    _

</llo_original>
